<compile_context>
chip_gen: v5e
topology: v5e:2x2
jax: 0.10.0
libtpu: 0.0.40
codegen_flags: <defaults>
</compile_context>

<pallas_src>
import math

import jax
import jax.numpy as jnp
from jax.experimental import pallas as pl
from jax.experimental.pallas import tpu as pltpu

# ---- model dimensions (small, consistent with the module) -----------------
HDIM = 24          # d_model, must be divisible by nhead=3
PATH_DIM = 16      # path_dim
NHEAD = 3
HEAD_DIM = HDIM // NHEAD
DFF = 128          # dim_feedforward
B = 2              # batch
S = 8              # src sequence length
EPS = 1e-5         # LayerNorm eps (PyTorch default)
LANE = 128         # slab lane width (f32)

# LayerNorm slot indices inside the packed (7, HDIM) gamma/beta tensors:
# 0: enc.norm1  1: enc.norm2  2: enc.final_norm
# 3: dec.norm1  4: dec.norm2  5: dec.norm3  6: dec.final_norm


# ---------------------------------------------------------------------------
# Static layout of the single lane-dense weight slab: name -> (row0, rows, cols)
# Every tensor's row offset is aligned to 8 (sublane tile), last dim <= 128.
# ---------------------------------------------------------------------------
def _build_layout():
    layout = {}
    row = 0

    def add(name, shape):
        nonlocal row
        r, c = shape
        layout[name] = (row, r, c)
        row += -(-r // 8) * 8  # round rows up to a multiple of 8

    add("wt", (PATH_DIM, HDIM))            # tgt_transform weight (pre-transposed)
    add("bt", (1, HDIM))                   # tgt_transform bias
    for pre in ("e", "ds", "dc"):          # enc self, dec self, dec cross
        add(f"{pre}_wq", (HDIM, HDIM))
        add(f"{pre}_wk", (HDIM, HDIM))
        add(f"{pre}_wv", (HDIM, HDIM))
        add(f"{pre}_wo", (HDIM, HDIM))
        add(f"{pre}_bqkv", (3, HDIM))      # row 0/1/2 = q/k/v bias
        add(f"{pre}_bo", (1, HDIM))
    for pre in ("e", "d"):                 # enc FFN, dec FFN
        add(f"{pre}_w1", (HDIM, DFF))
        add(f"{pre}_b1", (1, DFF))
        add(f"{pre}_w2", (DFF, HDIM))
        add(f"{pre}_b2", (1, HDIM))
    add("ln_g", (7, HDIM))
    add("ln_b", (7, HDIM))
    return layout, row


LAYOUT, SLAB_ROWS = _build_layout()        # SLAB_ROWS == 712 -> ~364 KiB f32


def pack_params(p):
    """One-time packing of the parameter dict into the (SLAB_ROWS, 128) slab."""
    slab = jnp.zeros((SLAB_ROWS, LANE), jnp.float32)
    for name, (r0, nr, nc) in LAYOUT.items():
        arr = jnp.asarray(p[name], jnp.float32).reshape(nr, nc)
        slab = slab.at[r0:r0 + nr, :nc].set(arr)
    return slab


# ---------------------------------------------------------------------------
# Kernel (processes `bsz` batch elements per grid step, bsz is static)
# ---------------------------------------------------------------------------
def make_kernel(bsz, s_len):
    scale = 1.0 / math.sqrt(HEAD_DIM)

    def kernel(tgt_ref, src_ref, slab_ref, out_ref):
        f32 = jnp.float32

        def W(name):
            r0, nr, nc = LAYOUT[name]
            return slab_ref[r0:r0 + nr, :nc]

        ln_g = W("ln_g")                   # (7, HDIM)
        ln_b = W("ln_b")                   # (7, HDIM)

        def layernorm(x, i):
            mu = jnp.mean(x, axis=-1, keepdims=True)
            xc = x - mu
            var = jnp.mean(xc * xc, axis=-1, keepdims=True)
            return xc * jax.lax.rsqrt(var + EPS) * ln_g[i:i + 1, :] + ln_b[i:i + 1, :]

        def softmax_rows(s):
            s = s - jnp.max(s, axis=-1, keepdims=True)
            p = jnp.exp(s)
            inv = pl.reciprocal(jnp.sum(p, axis=-1, keepdims=True), approx=True)
            return p * inv

        def mha(xq, xkv, pre, tq, tk):
            # xq: (bsz*tq, HDIM), xkv: (bsz*tk, HDIM); batch elements stacked on rows.
            bqkv = W(f"{pre}_bqkv")        # (3, HDIM)
            q = jnp.dot(xq, W(f"{pre}_wq"), preferred_element_type=f32) + bqkv[0:1, :]
            k = jnp.dot(xkv, W(f"{pre}_wk"), preferred_element_type=f32) + bqkv[1:2, :]
            v = jnp.dot(xkv, W(f"{pre}_wv"), preferred_element_type=f32) + bqkv[2:3, :]
            ctx_blocks = []
            for b in range(bsz):           # static unroll over batch
                qb = q[b * tq:(b + 1) * tq, :]
                kb = k[b * tk:(b + 1) * tk, :]
                vb = v[b * tk:(b + 1) * tk, :]
                heads = []
                for h in range(NHEAD):     # static unroll over heads
                    qh = qb[:, h * HEAD_DIM:(h + 1) * HEAD_DIM]
                    kh = kb[:, h * HEAD_DIM:(h + 1) * HEAD_DIM]
                    vh = vb[:, h * HEAD_DIM:(h + 1) * HEAD_DIM]
                    s = jax.lax.dot_general(
                        qh, kh, (((1,), (1,)), ((), ())),
                        preferred_element_type=f32) * scale       # (tq, tk)
                    heads.append(jnp.dot(softmax_rows(s), vh,
                                         preferred_element_type=f32))
                ctx_blocks.append(jnp.concatenate(heads, axis=-1))  # (tq, HDIM)
            ctx = ctx_blocks[0] if bsz == 1 else jnp.concatenate(ctx_blocks, axis=0)
            return jnp.dot(ctx, W(f"{pre}_wo"), preferred_element_type=f32) + W(f"{pre}_bo")

        def self_attn_len1(y, pre):
            # Exact shortcut for length-1 sequences: softmax([x]) == 1 -> ctx == v.
            v = jnp.dot(y, W(f"{pre}_wv"), preferred_element_type=f32) + W(f"{pre}_bqkv")[2:3, :]
            return jnp.dot(v, W(f"{pre}_wo"), preferred_element_type=f32) + W(f"{pre}_bo")

        def ffn(x, pre):
            h = jnp.dot(x, W(f"{pre}_w1"), preferred_element_type=f32) + W(f"{pre}_b1")
            h = jnp.maximum(h, 0.0)        # ReLU (default nn.Transformer activation)
            return jnp.dot(h, W(f"{pre}_w2"), preferred_element_type=f32) + W(f"{pre}_b2")

        # --- gather inputs (flatten batch onto rows) ---------------------------
        if bsz == 1:
            src = src_ref[0]                                   # (S, HDIM)
            tgt = tgt_ref[0]                                   # (1, PATH_DIM)
        else:
            src = jnp.concatenate([src_ref[b] for b in range(bsz)], axis=0)  # (bsz*S, HDIM)
            tgt = jnp.concatenate([tgt_ref[b] for b in range(bsz)], axis=0)  # (bsz, PATH_DIM)

        # --- tgt_transform: Linear(path_dim -> hdim) ---------------------------
        htgt = jnp.dot(tgt, W("wt"), preferred_element_type=f32) + W("bt")   # (bsz, HDIM)

        # --- encoder layer (post-norm) + encoder final norm --------------------
        x = src
        x = layernorm(x + mha(x, x, "e", s_len, s_len), 0)
        x = layernorm(x + ffn(x, "e"), 1)
        mem = layernorm(x, 2)                                   # (bsz*S, HDIM)

        # --- decoder layer (post-norm) + decoder final norm --------------------
        y = htgt                                                # (bsz, HDIM), Tq=1 / batch
        y = layernorm(y + self_attn_len1(y, "ds"), 3)
        y = layernorm(y + mha(y, mem, "dc", 1, s_len), 4)
        y = layernorm(y + ffn(y, "d"), 5)
        y = layernorm(y, 6)

        for b in range(bsz):
            out_ref[b] = y[b:b + 1, :]                          # (1, HDIM)

    return kernel


def _batch_per_step(nb):
    """v7x has 2 TensorCores -> keep a parallel per-batch grid; v5e/v6e have a
    single TC where the grid is a serial loop -> fold the batch into 1 step."""
    try:
        kind = jax.devices()[0].device_kind.lower()
    except Exception:
        kind = ""
    if "v7" in kind and nb > 1:
        return 1
    return nb


def path_encoder_transformer(src, tgt, slab):
    """src: (B, S, HDIM) f32, tgt: (B, PATH_DIM) f32, slab: packed params.
    Returns (B, 1, HDIM) f32."""
    nb, s_len, _ = src.shape
    bsz = _batch_per_step(nb)
    tgt3 = tgt.reshape(nb, 1, PATH_DIM)

    return pl.pallas_call(
        make_kernel(bsz, s_len),
        out_shape=jax.ShapeDtypeStruct((nb, 1, HDIM), jnp.float32),
        grid=(nb // bsz,),
        in_specs=[
            pl.BlockSpec((bsz, 1, PATH_DIM), lambda i: (i, 0, 0)),   # tgt
            pl.BlockSpec((bsz, s_len, HDIM), lambda i: (i, 0, 0)),   # src
            pl.BlockSpec((SLAB_ROWS, LANE), lambda i: (0, 0)),       # weight slab
        ],
        out_specs=pl.BlockSpec((bsz, 1, HDIM), lambda i: (i, 0, 0)),
        compiler_params=pltpu.CompilerParams(
            dimension_semantics=("parallel",)),
    )(tgt3, src, slab)


# ---------------------------------------------------------------------------
# Parameters + pure-JAX reference
# ---------------------------------------------------------------------------
def init_params(key):
    ks = iter(jax.random.split(key, 64))

    def w(shape, scale=0.1):
        return jax.random.uniform(next(ks), shape, jnp.float32, -scale, scale)

    p = {}
    p["wt"] = w((PATH_DIM, HDIM))          # pre-transposed (in, out)
    p["bt"] = w((1, HDIM))
    for pre in ("e", "ds", "dc"):
        p[f"{pre}_wq"] = w((HDIM, HDIM))   # full matrices; heads = contiguous
        p[f"{pre}_wk"] = w((HDIM, HDIM))   # 8-column groups (PyTorch in_proj order)
        p[f"{pre}_wv"] = w((HDIM, HDIM))
        p[f"{pre}_wo"] = w((HDIM, HDIM))
        p[f"{pre}_bqkv"] = w((3, HDIM))
        p[f"{pre}_bo"] = w((1, HDIM))
    for pre in ("e", "d"):
        p[f"{pre}_w1"] = w((HDIM, DFF))
        p[f"{pre}_b1"] = w((1, DFF))
        p[f"{pre}_w2"] = w((DFF, HDIM))
        p[f"{pre}_b2"] = w((1, HDIM))
    p["ln_g"] = jnp.ones((7, HDIM), jnp.float32)
    p["ln_b"] = jnp.zeros((7, HDIM), jnp.float32)
    return p


def reference_forward(src, tgt, p):
    """Pure-JAX reference with identical math (eval-mode nn.Transformer)."""
    def ln(x, i):
        mu = jnp.mean(x, -1, keepdims=True)
        var = jnp.mean((x - mu) ** 2, -1, keepdims=True)
        return (x - mu) / jnp.sqrt(var + EPS) * p["ln_g"][i] + p["ln_b"][i]

    def mha(xq, xkv, pre):
        q = xq @ p[f"{pre}_wq"] + p[f"{pre}_bqkv"][0]
        k = xkv @ p[f"{pre}_wk"] + p[f"{pre}_bqkv"][1]
        v = xkv @ p[f"{pre}_wv"] + p[f"{pre}_bqkv"][2]
        nb, tq, tk = q.shape[0], q.shape[1], k.shape[1]
        qh = q.reshape(nb, tq, NHEAD, HEAD_DIM)
        kh = k.reshape(nb, tk, NHEAD, HEAD_DIM)
        vh = v.reshape(nb, tk, NHEAD, HEAD_DIM)
        s = jnp.einsum("bqhd,bkhd->bhqk", qh, kh) / math.sqrt(HEAD_DIM)
        a = jax.nn.softmax(s, axis=-1)
        ctx = jnp.einsum("bhqk,bkhd->bqhd", a, vh).reshape(nb, tq, HDIM)
        return ctx @ p[f"{pre}_wo"] + p[f"{pre}_bo"][0]

    def ffn(x, pre):
        h = jax.nn.relu(x @ p[f"{pre}_w1"] + p[f"{pre}_b1"][0])
        return h @ p[f"{pre}_w2"] + p[f"{pre}_b2"][0]

    htgt = (tgt @ p["wt"] + p["bt"][0])[:, None, :]   # (B, 1, HDIM)

    x = src
    x = ln(x + mha(x, x, "e"), 0)
    x = ln(x + ffn(x, "e"), 1)
    mem = ln(x, 2)

    y = htgt
    y = ln(y + mha(y, y, "ds"), 3)
    y = ln(y + mha(y, mem, "dc"), 4)
    y = ln(y + ffn(y, "d"), 5)
    y = ln(y, 6)
    return y


if __name__ == "__main__":
    key = jax.random.PRNGKey(0)
    k_src, k_tgt, k_par = jax.random.split(key, 3)
    src = jax.random.normal(k_src, (B, S, HDIM), jnp.float32)
    tgt = jax.random.normal(k_tgt, (B, PATH_DIM), jnp.float32)
    params = init_params(k_par)
    slab = pack_params(params)             # one-time lane-dense weight packing

    out = path_encoder_transformer(src, tgt, slab)
    out = jax.block_until_ready(out)
    assert out.shape == (B, 1, HDIM), out.shape

    ref = reference_forward(src, tgt, params)
    if not jnp.allclose(out, ref, atol=2e-3, rtol=2e-3):
        err = float(jnp.max(jnp.abs(out - ref)))
        raise ValueError(f"Pallas kernel mismatches reference (max abs err {err:.3e})")

    print("KERNEL_OK")
</pallas_src>

<mosaic_0001>
module attributes {stable_mosaic.version = 11 : i64} {
  func.func @kernel(%arg0: i32, %arg1: memref<2x1x16xf32, #tpu.memory_space<vmem>>, %arg2: memref<2x8x24xf32, #tpu.memory_space<vmem>>, %arg3: memref<712x128xf32, #tpu.memory_space<vmem>>, %arg4: memref<2x1x24xf32, #tpu.memory_space<vmem>>) attributes {dimension_semantics = [#tpu.dimension_semantics<parallel>], iteration_bounds = array<i64: 1>, scalar_prefetch = 0 : i64, scratch_operands = 0 : i64, tpu.core_type = #tpu.core_type<tc>, window_params = [{transform_indices = @transform_0, window_bounds = array<i64: 2, 1, 16>}, {transform_indices = @transform_1, window_bounds = array<i64: 2, 8, 24>}, {pipeline_mode = #tpu.pipeline_mode<synchronous>, transform_indices = @transform_2, window_bounds = array<i64: 712, 128>}, {transform_indices = @transform_3, window_bounds = array<i64: 2, 1, 24>}]} {
    %c696 = arith.constant 696 : index
    %c0 = arith.constant 0 : index
    %0 = vector.load %arg3[%c696, %c0] : memref<712x128xf32, #tpu.memory_space<vmem>>, vector<7x24xf32>
    %c704 = arith.constant 704 : index
    %c0_0 = arith.constant 0 : index
    %1 = vector.load %arg3[%c704, %c0_0] : memref<712x128xf32, #tpu.memory_space<vmem>>, vector<7x24xf32>
    %c0_1 = arith.constant 0 : index
    %c0_2 = arith.constant 0 : index
    %c0_3 = arith.constant 0 : index
    %2 = vector.load %arg2[%c0_1, %c0_2, %c0_3] : memref<2x8x24xf32, #tpu.memory_space<vmem>>, vector<1x8x24xf32>
    %3 = vector.shape_cast %2 : vector<1x8x24xf32> to vector<8x24xf32>
    %c1 = arith.constant 1 : index
    %c0_4 = arith.constant 0 : index
    %c0_5 = arith.constant 0 : index
    %4 = vector.load %arg2[%c1, %c0_4, %c0_5] : memref<2x8x24xf32, #tpu.memory_space<vmem>>, vector<1x8x24xf32>
    %5 = vector.shape_cast %4 : vector<1x8x24xf32> to vector<8x24xf32>
    %6 = tpu.concatenate %3, %5 in 0 : vector<8x24xf32>, vector<8x24xf32> -> vector<16x24xf32>
    %c0_6 = arith.constant 0 : index
    %c0_7 = arith.constant 0 : index
    %c0_8 = arith.constant 0 : index
    %7 = vector.load %arg1[%c0_6, %c0_7, %c0_8] : memref<2x1x16xf32, #tpu.memory_space<vmem>>, vector<1x1x16xf32>
    %8 = vector.shape_cast %7 : vector<1x1x16xf32> to vector<1x16xf32>
    %c1_9 = arith.constant 1 : index
    %c0_10 = arith.constant 0 : index
    %c0_11 = arith.constant 0 : index
    %9 = vector.load %arg1[%c1_9, %c0_10, %c0_11] : memref<2x1x16xf32, #tpu.memory_space<vmem>>, vector<1x1x16xf32>
    %10 = vector.shape_cast %9 : vector<1x1x16xf32> to vector<1x16xf32>
    %11 = tpu.concatenate %8, %10 in 0 : vector<1x16xf32>, vector<1x16xf32> -> vector<2x16xf32>
    %c0_12 = arith.constant 0 : index
    %c0_13 = arith.constant 0 : index
    %12 = vector.load %arg3[%c0_12, %c0_13] : memref<712x128xf32, #tpu.memory_space<vmem>>, vector<16x24xf32>
    %cst = arith.constant dense<0.000000e+00> : vector<2x24xf32>
    %13 = tpu.matmul %11, %12, %cst {dimension_numbers = #tpu.dot_dimension_numbers<[1], [0], [0], [1], [0, 0, 1, 1], [], []>} : vector<2x16xf32>, vector<16x24xf32>, vector<2x24xf32> -> vector<2x24xf32>
    %c16 = arith.constant 16 : index
    %c0_14 = arith.constant 0 : index
    %14 = vector.load %arg3[%c16, %c0_14] : memref<712x128xf32, #tpu.memory_space<vmem>>, vector<1x24xf32>
    %15 = vector.broadcast %14 : vector<1x24xf32> to vector<2x24xf32>
    %16 = arith.addf %13, %15 : vector<2x24xf32>
    %c120 = arith.constant 120 : index
    %c0_15 = arith.constant 0 : index
    %17 = vector.load %arg3[%c120, %c0_15] : memref<712x128xf32, #tpu.memory_space<vmem>>, vector<3x24xf32>
    %c24 = arith.constant 24 : index
    %c0_16 = arith.constant 0 : index
    %18 = vector.load %arg3[%c24, %c0_16] : memref<712x128xf32, #tpu.memory_space<vmem>>, vector<24x24xf32>
    %cst_17 = arith.constant dense<0.000000e+00> : vector<16x24xf32>
    %19 = tpu.matmul %6, %18, %cst_17 {dimension_numbers = #tpu.dot_dimension_numbers<[1], [0], [0], [1], [0, 0, 1, 1], [], []>} : vector<16x24xf32>, vector<24x24xf32>, vector<16x24xf32> -> vector<16x24xf32>
    %20 = vector.extract_strided_slice %17 {offsets = [0, 0], sizes = [1, 24], strides = [1, 1]} : vector<3x24xf32> to vector<1x24xf32>
    %21 = vector.broadcast %20 : vector<1x24xf32> to vector<16x24xf32>
    %22 = arith.addf %19, %21 : vector<16x24xf32>
    %c48 = arith.constant 48 : index
    %c0_18 = arith.constant 0 : index
    %23 = vector.load %arg3[%c48, %c0_18] : memref<712x128xf32, #tpu.memory_space<vmem>>, vector<24x24xf32>
    %cst_19 = arith.constant dense<0.000000e+00> : vector<16x24xf32>
    %24 = tpu.matmul %6, %23, %cst_19 {dimension_numbers = #tpu.dot_dimension_numbers<[1], [0], [0], [1], [0, 0, 1, 1], [], []>} : vector<16x24xf32>, vector<24x24xf32>, vector<16x24xf32> -> vector<16x24xf32>
    %25 = vector.extract_strided_slice %17 {offsets = [1, 0], sizes = [1, 24], strides = [1, 1]} : vector<3x24xf32> to vector<1x24xf32>
    %26 = vector.broadcast %25 : vector<1x24xf32> to vector<16x24xf32>
    %27 = arith.addf %24, %26 : vector<16x24xf32>
    %c72 = arith.constant 72 : index
    %c0_20 = arith.constant 0 : index
    %28 = vector.load %arg3[%c72, %c0_20] : memref<712x128xf32, #tpu.memory_space<vmem>>, vector<24x24xf32>
    %cst_21 = arith.constant dense<0.000000e+00> : vector<16x24xf32>
    %29 = tpu.matmul %6, %28, %cst_21 {dimension_numbers = #tpu.dot_dimension_numbers<[1], [0], [0], [1], [0, 0, 1, 1], [], []>} : vector<16x24xf32>, vector<24x24xf32>, vector<16x24xf32> -> vector<16x24xf32>
    %30 = vector.extract_strided_slice %17 {offsets = [2, 0], sizes = [1, 24], strides = [1, 1]} : vector<3x24xf32> to vector<1x24xf32>
    %31 = vector.broadcast %30 : vector<1x24xf32> to vector<16x24xf32>
    %32 = arith.addf %29, %31 : vector<16x24xf32>
    %33 = vector.extract_strided_slice %22 {offsets = [0, 0], sizes = [8, 24], strides = [1, 1]} : vector<16x24xf32> to vector<8x24xf32>
    %34 = vector.extract_strided_slice %27 {offsets = [0, 0], sizes = [8, 24], strides = [1, 1]} : vector<16x24xf32> to vector<8x24xf32>
    %35 = vector.extract_strided_slice %32 {offsets = [0, 0], sizes = [8, 24], strides = [1, 1]} : vector<16x24xf32> to vector<8x24xf32>
    %36 = vector.extract_strided_slice %33 {offsets = [0, 0], sizes = [8, 8], strides = [1, 1]} : vector<8x24xf32> to vector<8x8xf32>
    %37 = vector.extract_strided_slice %34 {offsets = [0, 0], sizes = [8, 8], strides = [1, 1]} : vector<8x24xf32> to vector<8x8xf32>
    %38 = vector.extract_strided_slice %35 {offsets = [0, 0], sizes = [8, 8], strides = [1, 1]} : vector<8x24xf32> to vector<8x8xf32>
    %cst_22 = arith.constant dense<0.000000e+00> : vector<8x8xf32>
    %39 = tpu.matmul %36, %37, %cst_22 {dimension_numbers = #tpu.dot_dimension_numbers<[1], [1], [0], [0], [0, 0, 1, 0], [], []>} : vector<8x8xf32>, vector<8x8xf32>, vector<8x8xf32> -> vector<8x8xf32>
    %cst_23 = arith.constant 0.353553385 : f32
    %40 = vector.broadcast %cst_23 : f32 to vector<8x8xf32>
    %41 = arith.mulf %39, %40 : vector<8x8xf32>
    %cst_24 = arith.constant dense<0xFF800000> : vector<8xf32>
    %42 = vector.multi_reduction <maximumf>, %41, %cst_24 [1] : vector<8x8xf32> to vector<8xf32>
    %43 = vector.shape_cast %42 : vector<8xf32> to vector<8x1xf32>
    %44 = vector.broadcast %43 : vector<8x1xf32> to vector<8x8xf32>
    %45 = arith.subf %41, %44 : vector<8x8xf32>
    %46 = math.exp %45 : vector<8x8xf32>
    %cst_25 = arith.constant dense<0.000000e+00> : vector<8xf32>
    %47 = vector.multi_reduction <add>, %46, %cst_25 [1] : vector<8x8xf32> to vector<8xf32>
    %48 = vector.shape_cast %47 : vector<8xf32> to vector<8x1xf32>
    %49 = tpu.reciprocal %48 {approx = true} : vector<8x1xf32> -> vector<8x1xf32>
    %50 = vector.broadcast %49 : vector<8x1xf32> to vector<8x8xf32>
    %51 = arith.mulf %46, %50 : vector<8x8xf32>
    %cst_26 = arith.constant dense<0.000000e+00> : vector<8x8xf32>
    %52 = tpu.matmul %51, %38, %cst_26 {dimension_numbers = #tpu.dot_dimension_numbers<[1], [0], [0], [1], [0, 0, 1, 1], [], []>} : vector<8x8xf32>, vector<8x8xf32>, vector<8x8xf32> -> vector<8x8xf32>
    %53 = vector.extract_strided_slice %33 {offsets = [0, 8], sizes = [8, 8], strides = [1, 1]} : vector<8x24xf32> to vector<8x8xf32>
    %54 = vector.extract_strided_slice %34 {offsets = [0, 8], sizes = [8, 8], strides = [1, 1]} : vector<8x24xf32> to vector<8x8xf32>
    %55 = vector.extract_strided_slice %35 {offsets = [0, 8], sizes = [8, 8], strides = [1, 1]} : vector<8x24xf32> to vector<8x8xf32>
    %cst_27 = arith.constant dense<0.000000e+00> : vector<8x8xf32>
    %56 = tpu.matmul %53, %54, %cst_27 {dimension_numbers = #tpu.dot_dimension_numbers<[1], [1], [0], [0], [0, 0, 1, 0], [], []>} : vector<8x8xf32>, vector<8x8xf32>, vector<8x8xf32> -> vector<8x8xf32>
    %cst_28 = arith.constant 0.353553385 : f32
    %57 = vector.broadcast %cst_28 : f32 to vector<8x8xf32>
    %58 = arith.mulf %56, %57 : vector<8x8xf32>
    %cst_29 = arith.constant dense<0xFF800000> : vector<8xf32>
    %59 = vector.multi_reduction <maximumf>, %58, %cst_29 [1] : vector<8x8xf32> to vector<8xf32>
    %60 = vector.shape_cast %59 : vector<8xf32> to vector<8x1xf32>
    %61 = vector.broadcast %60 : vector<8x1xf32> to vector<8x8xf32>
    %62 = arith.subf %58, %61 : vector<8x8xf32>
    %63 = math.exp %62 : vector<8x8xf32>
    %cst_30 = arith.constant dense<0.000000e+00> : vector<8xf32>
    %64 = vector.multi_reduction <add>, %63, %cst_30 [1] : vector<8x8xf32> to vector<8xf32>
    %65 = vector.shape_cast %64 : vector<8xf32> to vector<8x1xf32>
    %66 = tpu.reciprocal %65 {approx = true} : vector<8x1xf32> -> vector<8x1xf32>
    %67 = vector.broadcast %66 : vector<8x1xf32> to vector<8x8xf32>
    %68 = arith.mulf %63, %67 : vector<8x8xf32>
    %cst_31 = arith.constant dense<0.000000e+00> : vector<8x8xf32>
    %69 = tpu.matmul %68, %55, %cst_31 {dimension_numbers = #tpu.dot_dimension_numbers<[1], [0], [0], [1], [0, 0, 1, 1], [], []>} : vector<8x8xf32>, vector<8x8xf32>, vector<8x8xf32> -> vector<8x8xf32>
    %70 = vector.extract_strided_slice %33 {offsets = [0, 16], sizes = [8, 8], strides = [1, 1]} : vector<8x24xf32> to vector<8x8xf32>
    %71 = vector.extract_strided_slice %34 {offsets = [0, 16], sizes = [8, 8], strides = [1, 1]} : vector<8x24xf32> to vector<8x8xf32>
    %72 = vector.extract_strided_slice %35 {offsets = [0, 16], sizes = [8, 8], strides = [1, 1]} : vector<8x24xf32> to vector<8x8xf32>
    %cst_32 = arith.constant dense<0.000000e+00> : vector<8x8xf32>
    %73 = tpu.matmul %70, %71, %cst_32 {dimension_numbers = #tpu.dot_dimension_numbers<[1], [1], [0], [0], [0, 0, 1, 0], [], []>} : vector<8x8xf32>, vector<8x8xf32>, vector<8x8xf32> -> vector<8x8xf32>
    %cst_33 = arith.constant 0.353553385 : f32
    %74 = vector.broadcast %cst_33 : f32 to vector<8x8xf32>
    %75 = arith.mulf %73, %74 : vector<8x8xf32>
    %cst_34 = arith.constant dense<0xFF800000> : vector<8xf32>
    %76 = vector.multi_reduction <maximumf>, %75, %cst_34 [1] : vector<8x8xf32> to vector<8xf32>
    %77 = vector.shape_cast %76 : vector<8xf32> to vector<8x1xf32>
    %78 = vector.broadcast %77 : vector<8x1xf32> to vector<8x8xf32>
    %79 = arith.subf %75, %78 : vector<8x8xf32>
    %80 = math.exp %79 : vector<8x8xf32>
    %cst_35 = arith.constant dense<0.000000e+00> : vector<8xf32>
    %81 = vector.multi_reduction <add>, %80, %cst_35 [1] : vector<8x8xf32> to vector<8xf32>
    %82 = vector.shape_cast %81 : vector<8xf32> to vector<8x1xf32>
    %83 = tpu.reciprocal %82 {approx = true} : vector<8x1xf32> -> vector<8x1xf32>
    %84 = vector.broadcast %83 : vector<8x1xf32> to vector<8x8xf32>
    %85 = arith.mulf %80, %84 : vector<8x8xf32>
    %cst_36 = arith.constant dense<0.000000e+00> : vector<8x8xf32>
    %86 = tpu.matmul %85, %72, %cst_36 {dimension_numbers = #tpu.dot_dimension_numbers<[1], [0], [0], [1], [0, 0, 1, 1], [], []>} : vector<8x8xf32>, vector<8x8xf32>, vector<8x8xf32> -> vector<8x8xf32>
    %87 = tpu.concatenate %52, %69, %86 in 1 : vector<8x8xf32>, vector<8x8xf32>, vector<8x8xf32> -> vector<8x24xf32>
    %88 = vector.extract_strided_slice %22 {offsets = [8, 0], sizes = [8, 24], strides = [1, 1]} : vector<16x24xf32> to vector<8x24xf32>
    %89 = vector.extract_strided_slice %27 {offsets = [8, 0], sizes = [8, 24], strides = [1, 1]} : vector<16x24xf32> to vector<8x24xf32>
    %90 = vector.extract_strided_slice %32 {offsets = [8, 0], sizes = [8, 24], strides = [1, 1]} : vector<16x24xf32> to vector<8x24xf32>
    %91 = vector.extract_strided_slice %88 {offsets = [0, 0], sizes = [8, 8], strides = [1, 1]} : vector<8x24xf32> to vector<8x8xf32>
    %92 = vector.extract_strided_slice %89 {offsets = [0, 0], sizes = [8, 8], strides = [1, 1]} : vector<8x24xf32> to vector<8x8xf32>
    %93 = vector.extract_strided_slice %90 {offsets = [0, 0], sizes = [8, 8], strides = [1, 1]} : vector<8x24xf32> to vector<8x8xf32>
    %cst_37 = arith.constant dense<0.000000e+00> : vector<8x8xf32>
    %94 = tpu.matmul %91, %92, %cst_37 {dimension_numbers = #tpu.dot_dimension_numbers<[1], [1], [0], [0], [0, 0, 1, 0], [], []>} : vector<8x8xf32>, vector<8x8xf32>, vector<8x8xf32> -> vector<8x8xf32>
    %cst_38 = arith.constant 0.353553385 : f32
    %95 = vector.broadcast %cst_38 : f32 to vector<8x8xf32>
    %96 = arith.mulf %94, %95 : vector<8x8xf32>
    %cst_39 = arith.constant dense<0xFF800000> : vector<8xf32>
    %97 = vector.multi_reduction <maximumf>, %96, %cst_39 [1] : vector<8x8xf32> to vector<8xf32>
    %98 = vector.shape_cast %97 : vector<8xf32> to vector<8x1xf32>
    %99 = vector.broadcast %98 : vector<8x1xf32> to vector<8x8xf32>
    %100 = arith.subf %96, %99 : vector<8x8xf32>
    %101 = math.exp %100 : vector<8x8xf32>
    %cst_40 = arith.constant dense<0.000000e+00> : vector<8xf32>
    %102 = vector.multi_reduction <add>, %101, %cst_40 [1] : vector<8x8xf32> to vector<8xf32>
    %103 = vector.shape_cast %102 : vector<8xf32> to vector<8x1xf32>
    %104 = tpu.reciprocal %103 {approx = true} : vector<8x1xf32> -> vector<8x1xf32>
    %105 = vector.broadcast %104 : vector<8x1xf32> to vector<8x8xf32>
    %106 = arith.mulf %101, %105 : vector<8x8xf32>
    %cst_41 = arith.constant dense<0.000000e+00> : vector<8x8xf32>
    %107 = tpu.matmul %106, %93, %cst_41 {dimension_numbers = #tpu.dot_dimension_numbers<[1], [0], [0], [1], [0, 0, 1, 1], [], []>} : vector<8x8xf32>, vector<8x8xf32>, vector<8x8xf32> -> vector<8x8xf32>
    %108 = vector.extract_strided_slice %88 {offsets = [0, 8], sizes = [8, 8], strides = [1, 1]} : vector<8x24xf32> to vector<8x8xf32>
    %109 = vector.extract_strided_slice %89 {offsets = [0, 8], sizes = [8, 8], strides = [1, 1]} : vector<8x24xf32> to vector<8x8xf32>
    %110 = vector.extract_strided_slice %90 {offsets = [0, 8], sizes = [8, 8], strides = [1, 1]} : vector<8x24xf32> to vector<8x8xf32>
    %cst_42 = arith.constant dense<0.000000e+00> : vector<8x8xf32>
    %111 = tpu.matmul %108, %109, %cst_42 {dimension_numbers = #tpu.dot_dimension_numbers<[1], [1], [0], [0], [0, 0, 1, 0], [], []>} : vector<8x8xf32>, vector<8x8xf32>, vector<8x8xf32> -> vector<8x8xf32>
    %cst_43 = arith.constant 0.353553385 : f32
    %112 = vector.broadcast %cst_43 : f32 to vector<8x8xf32>
    %113 = arith.mulf %111, %112 : vector<8x8xf32>
    %cst_44 = arith.constant dense<0xFF800000> : vector<8xf32>
    %114 = vector.multi_reduction <maximumf>, %113, %cst_44 [1] : vector<8x8xf32> to vector<8xf32>
    %115 = vector.shape_cast %114 : vector<8xf32> to vector<8x1xf32>
    %116 = vector.broadcast %115 : vector<8x1xf32> to vector<8x8xf32>
    %117 = arith.subf %113, %116 : vector<8x8xf32>
    %118 = math.exp %117 : vector<8x8xf32>
    %cst_45 = arith.constant dense<0.000000e+00> : vector<8xf32>
    %119 = vector.multi_reduction <add>, %118, %cst_45 [1] : vector<8x8xf32> to vector<8xf32>
    %120 = vector.shape_cast %119 : vector<8xf32> to vector<8x1xf32>
    %121 = tpu.reciprocal %120 {approx = true} : vector<8x1xf32> -> vector<8x1xf32>
    %122 = vector.broadcast %121 : vector<8x1xf32> to vector<8x8xf32>
    %123 = arith.mulf %118, %122 : vector<8x8xf32>
    %cst_46 = arith.constant dense<0.000000e+00> : vector<8x8xf32>
    %124 = tpu.matmul %123, %110, %cst_46 {dimension_numbers = #tpu.dot_dimension_numbers<[1], [0], [0], [1], [0, 0, 1, 1], [], []>} : vector<8x8xf32>, vector<8x8xf32>, vector<8x8xf32> -> vector<8x8xf32>
    %125 = vector.extract_strided_slice %88 {offsets = [0, 16], sizes = [8, 8], strides = [1, 1]} : vector<8x24xf32> to vector<8x8xf32>
    %126 = vector.extract_strided_slice %89 {offsets = [0, 16], sizes = [8, 8], strides = [1, 1]} : vector<8x24xf32> to vector<8x8xf32>
    %127 = vector.extract_strided_slice %90 {offsets = [0, 16], sizes = [8, 8], strides = [1, 1]} : vector<8x24xf32> to vector<8x8xf32>
    %cst_47 = arith.constant dense<0.000000e+00> : vector<8x8xf32>
    %128 = tpu.matmul %125, %126, %cst_47 {dimension_numbers = #tpu.dot_dimension_numbers<[1], [1], [0], [0], [0, 0, 1, 0], [], []>} : vector<8x8xf32>, vector<8x8xf32>, vector<8x8xf32> -> vector<8x8xf32>
    %cst_48 = arith.constant 0.353553385 : f32
    %129 = vector.broadcast %cst_48 : f32 to vector<8x8xf32>
    %130 = arith.mulf %128, %129 : vector<8x8xf32>
    %cst_49 = arith.constant dense<0xFF800000> : vector<8xf32>
    %131 = vector.multi_reduction <maximumf>, %130, %cst_49 [1] : vector<8x8xf32> to vector<8xf32>
    %132 = vector.shape_cast %131 : vector<8xf32> to vector<8x1xf32>
    %133 = vector.broadcast %132 : vector<8x1xf32> to vector<8x8xf32>
    %134 = arith.subf %130, %133 : vector<8x8xf32>
    %135 = math.exp %134 : vector<8x8xf32>
    %cst_50 = arith.constant dense<0.000000e+00> : vector<8xf32>
    %136 = vector.multi_reduction <add>, %135, %cst_50 [1] : vector<8x8xf32> to vector<8xf32>
    %137 = vector.shape_cast %136 : vector<8xf32> to vector<8x1xf32>
    %138 = tpu.reciprocal %137 {approx = true} : vector<8x1xf32> -> vector<8x1xf32>
    %139 = vector.broadcast %138 : vector<8x1xf32> to vector<8x8xf32>
    %140 = arith.mulf %135, %139 : vector<8x8xf32>
    %cst_51 = arith.constant dense<0.000000e+00> : vector<8x8xf32>
    %141 = tpu.matmul %140, %127, %cst_51 {dimension_numbers = #tpu.dot_dimension_numbers<[1], [0], [0], [1], [0, 0, 1, 1], [], []>} : vector<8x8xf32>, vector<8x8xf32>, vector<8x8xf32> -> vector<8x8xf32>
    %142 = tpu.concatenate %107, %124, %141 in 1 : vector<8x8xf32>, vector<8x8xf32>, vector<8x8xf32> -> vector<8x24xf32>
    %143 = tpu.concatenate %87, %142 in 0 : vector<8x24xf32>, vector<8x24xf32> -> vector<16x24xf32>
    %c96 = arith.constant 96 : index
    %c0_52 = arith.constant 0 : index
    %144 = vector.load %arg3[%c96, %c0_52] : memref<712x128xf32, #tpu.memory_space<vmem>>, vector<24x24xf32>
    %cst_53 = arith.constant dense<0.000000e+00> : vector<16x24xf32>
    %145 = tpu.matmul %143, %144, %cst_53 {dimension_numbers = #tpu.dot_dimension_numbers<[1], [0], [0], [1], [0, 0, 1, 1], [], []>} : vector<16x24xf32>, vector<24x24xf32>, vector<16x24xf32> -> vector<16x24xf32>
    %c128 = arith.constant 128 : index
    %c0_54 = arith.constant 0 : index
    %146 = vector.load %arg3[%c128, %c0_54] : memref<712x128xf32, #tpu.memory_space<vmem>>, vector<1x24xf32>
    %147 = vector.broadcast %146 : vector<1x24xf32> to vector<16x24xf32>
    %148 = arith.addf %145, %147 : vector<16x24xf32>
    %149 = arith.addf %6, %148 : vector<16x24xf32>
    %cst_55 = arith.constant dense<0.000000e+00> : vector<16xf32>
    %150 = vector.multi_reduction <add>, %149, %cst_55 [1] : vector<16x24xf32> to vector<16xf32>
    %151 = vector.shape_cast %150 : vector<16xf32> to vector<16x1xf32>
    %cst_56 = arith.constant 2.400000e+01 : f32
    %152 = vector.broadcast %cst_56 : f32 to vector<16x1xf32>
    %153 = arith.divf %151, %152 : vector<16x1xf32>
    %154 = vector.broadcast %153 : vector<16x1xf32> to vector<16x24xf32>
    %155 = arith.subf %149, %154 : vector<16x24xf32>
    %156 = arith.mulf %155, %155 : vector<16x24xf32>
    %cst_57 = arith.constant dense<0.000000e+00> : vector<16xf32>
    %157 = vector.multi_reduction <add>, %156, %cst_57 [1] : vector<16x24xf32> to vector<16xf32>
    %158 = vector.shape_cast %157 : vector<16xf32> to vector<16x1xf32>
    %cst_58 = arith.constant 2.400000e+01 : f32
    %159 = vector.broadcast %cst_58 : f32 to vector<16x1xf32>
    %160 = arith.divf %158, %159 : vector<16x1xf32>
    %cst_59 = arith.constant 9.99999974E-6 : f32
    %161 = vector.broadcast %cst_59 : f32 to vector<16x1xf32>
    %162 = arith.addf %160, %161 : vector<16x1xf32>
    %163 = math.rsqrt %162 : vector<16x1xf32>
    %164 = vector.broadcast %163 : vector<16x1xf32> to vector<16x24xf32>
    %165 = arith.mulf %155, %164 : vector<16x24xf32>
    %166 = vector.extract_strided_slice %0 {offsets = [0, 0], sizes = [1, 24], strides = [1, 1]} : vector<7x24xf32> to vector<1x24xf32>
    %167 = vector.broadcast %166 : vector<1x24xf32> to vector<16x24xf32>
    %168 = arith.mulf %165, %167 : vector<16x24xf32>
    %169 = vector.extract_strided_slice %1 {offsets = [0, 0], sizes = [1, 24], strides = [1, 1]} : vector<7x24xf32> to vector<1x24xf32>
    %170 = vector.broadcast %169 : vector<1x24xf32> to vector<16x24xf32>
    %171 = arith.addf %168, %170 : vector<16x24xf32>
    %c360 = arith.constant 360 : index
    %c0_60 = arith.constant 0 : index
    %172 = vector.load %arg3[%c360, %c0_60] : memref<712x128xf32, #tpu.memory_space<vmem>>, vector<24x128xf32>
    %cst_61 = arith.constant dense<0.000000e+00> : vector<16x128xf32>
    %173 = tpu.matmul %171, %172, %cst_61 {dimension_numbers = #tpu.dot_dimension_numbers<[1], [0], [0], [1], [0, 0, 1, 1], [], []>} : vector<16x24xf32>, vector<24x128xf32>, vector<16x128xf32> -> vector<16x128xf32>
    %c384 = arith.constant 384 : index
    %c0_62 = arith.constant 0 : index
    %174 = vector.load %arg3[%c384, %c0_62] : memref<712x128xf32, #tpu.memory_space<vmem>>, vector<1x128xf32>
    %175 = vector.broadcast %174 : vector<1x128xf32> to vector<16x128xf32>
    %176 = arith.addf %173, %175 : vector<16x128xf32>
    %cst_63 = arith.constant 0.000000e+00 : f32
    %177 = vector.broadcast %cst_63 : f32 to vector<16x128xf32>
    %178 = arith.maximumf %176, %177 : vector<16x128xf32>
    %c392 = arith.constant 392 : index
    %c0_64 = arith.constant 0 : index
    %179 = vector.load %arg3[%c392, %c0_64] : memref<712x128xf32, #tpu.memory_space<vmem>>, vector<128x24xf32>
    %cst_65 = arith.constant dense<0.000000e+00> : vector<16x24xf32>
    %180 = tpu.matmul %178, %179, %cst_65 {dimension_numbers = #tpu.dot_dimension_numbers<[1], [0], [0], [1], [0, 0, 1, 1], [], []>} : vector<16x128xf32>, vector<128x24xf32>, vector<16x24xf32> -> vector<16x24xf32>
    %c520 = arith.constant 520 : index
    %c0_66 = arith.constant 0 : index
    %181 = vector.load %arg3[%c520, %c0_66] : memref<712x128xf32, #tpu.memory_space<vmem>>, vector<1x24xf32>
    %182 = vector.broadcast %181 : vector<1x24xf32> to vector<16x24xf32>
    %183 = arith.addf %180, %182 : vector<16x24xf32>
    %184 = arith.addf %171, %183 : vector<16x24xf32>
    %cst_67 = arith.constant dense<0.000000e+00> : vector<16xf32>
    %185 = vector.multi_reduction <add>, %184, %cst_67 [1] : vector<16x24xf32> to vector<16xf32>
    %186 = vector.shape_cast %185 : vector<16xf32> to vector<16x1xf32>
    %cst_68 = arith.constant 2.400000e+01 : f32
    %187 = vector.broadcast %cst_68 : f32 to vector<16x1xf32>
    %188 = arith.divf %186, %187 : vector<16x1xf32>
    %189 = vector.broadcast %188 : vector<16x1xf32> to vector<16x24xf32>
    %190 = arith.subf %184, %189 : vector<16x24xf32>
    %191 = arith.mulf %190, %190 : vector<16x24xf32>
    %cst_69 = arith.constant dense<0.000000e+00> : vector<16xf32>
    %192 = vector.multi_reduction <add>, %191, %cst_69 [1] : vector<16x24xf32> to vector<16xf32>
    %193 = vector.shape_cast %192 : vector<16xf32> to vector<16x1xf32>
    %cst_70 = arith.constant 2.400000e+01 : f32
    %194 = vector.broadcast %cst_70 : f32 to vector<16x1xf32>
    %195 = arith.divf %193, %194 : vector<16x1xf32>
    %cst_71 = arith.constant 9.99999974E-6 : f32
    %196 = vector.broadcast %cst_71 : f32 to vector<16x1xf32>
    %197 = arith.addf %195, %196 : vector<16x1xf32>
    %198 = math.rsqrt %197 : vector<16x1xf32>
    %199 = vector.broadcast %198 : vector<16x1xf32> to vector<16x24xf32>
    %200 = arith.mulf %190, %199 : vector<16x24xf32>
    %201 = vector.extract_strided_slice %0 {offsets = [1, 0], sizes = [1, 24], strides = [1, 1]} : vector<7x24xf32> to vector<1x24xf32>
    %202 = vector.broadcast %201 : vector<1x24xf32> to vector<16x24xf32>
    %203 = arith.mulf %200, %202 : vector<16x24xf32>
    %204 = vector.extract_strided_slice %1 {offsets = [1, 0], sizes = [1, 24], strides = [1, 1]} : vector<7x24xf32> to vector<1x24xf32>
    %205 = vector.broadcast %204 : vector<1x24xf32> to vector<16x24xf32>
    %206 = arith.addf %203, %205 : vector<16x24xf32>
    %cst_72 = arith.constant dense<0.000000e+00> : vector<16xf32>
    %207 = vector.multi_reduction <add>, %206, %cst_72 [1] : vector<16x24xf32> to vector<16xf32>
    %208 = vector.shape_cast %207 : vector<16xf32> to vector<16x1xf32>
    %cst_73 = arith.constant 2.400000e+01 : f32
    %209 = vector.broadcast %cst_73 : f32 to vector<16x1xf32>
    %210 = arith.divf %208, %209 : vector<16x1xf32>
    %211 = vector.broadcast %210 : vector<16x1xf32> to vector<16x24xf32>
    %212 = arith.subf %206, %211 : vector<16x24xf32>
    %213 = arith.mulf %212, %212 : vector<16x24xf32>
    %cst_74 = arith.constant dense<0.000000e+00> : vector<16xf32>
    %214 = vector.multi_reduction <add>, %213, %cst_74 [1] : vector<16x24xf32> to vector<16xf32>
    %215 = vector.shape_cast %214 : vector<16xf32> to vector<16x1xf32>
    %cst_75 = arith.constant 2.400000e+01 : f32
    %216 = vector.broadcast %cst_75 : f32 to vector<16x1xf32>
    %217 = arith.divf %215, %216 : vector<16x1xf32>
    %cst_76 = arith.constant 9.99999974E-6 : f32
    %218 = vector.broadcast %cst_76 : f32 to vector<16x1xf32>
    %219 = arith.addf %217, %218 : vector<16x1xf32>
    %220 = math.rsqrt %219 : vector<16x1xf32>
    %221 = vector.broadcast %220 : vector<16x1xf32> to vector<16x24xf32>
    %222 = arith.mulf %212, %221 : vector<16x24xf32>
    %223 = vector.extract_strided_slice %0 {offsets = [2, 0], sizes = [1, 24], strides = [1, 1]} : vector<7x24xf32> to vector<1x24xf32>
    %224 = vector.broadcast %223 : vector<1x24xf32> to vector<16x24xf32>
    %225 = arith.mulf %222, %224 : vector<16x24xf32>
    %226 = vector.extract_strided_slice %1 {offsets = [2, 0], sizes = [1, 24], strides = [1, 1]} : vector<7x24xf32> to vector<1x24xf32>
    %227 = vector.broadcast %226 : vector<1x24xf32> to vector<16x24xf32>
    %228 = arith.addf %225, %227 : vector<16x24xf32>
    %c184 = arith.constant 184 : index
    %c0_77 = arith.constant 0 : index
    %229 = vector.load %arg3[%c184, %c0_77] : memref<712x128xf32, #tpu.memory_space<vmem>>, vector<24x24xf32>
    %cst_78 = arith.constant dense<0.000000e+00> : vector<2x24xf32>
    %230 = tpu.matmul %16, %229, %cst_78 {dimension_numbers = #tpu.dot_dimension_numbers<[1], [0], [0], [1], [0, 0, 1, 1], [], []>} : vector<2x24xf32>, vector<24x24xf32>, vector<2x24xf32> -> vector<2x24xf32>
    %c232 = arith.constant 232 : index
    %c0_79 = arith.constant 0 : index
    %231 = vector.load %arg3[%c232, %c0_79] : memref<712x128xf32, #tpu.memory_space<vmem>>, vector<3x24xf32>
    %232 = vector.extract_strided_slice %231 {offsets = [2, 0], sizes = [1, 24], strides = [1, 1]} : vector<3x24xf32> to vector<1x24xf32>
    %233 = vector.broadcast %232 : vector<1x24xf32> to vector<2x24xf32>
    %234 = arith.addf %230, %233 : vector<2x24xf32>
    %c208 = arith.constant 208 : index
    %c0_80 = arith.constant 0 : index
    %235 = vector.load %arg3[%c208, %c0_80] : memref<712x128xf32, #tpu.memory_space<vmem>>, vector<24x24xf32>
    %cst_81 = arith.constant dense<0.000000e+00> : vector<2x24xf32>
    %236 = tpu.matmul %234, %235, %cst_81 {dimension_numbers = #tpu.dot_dimension_numbers<[1], [0], [0], [1], [0, 0, 1, 1], [], []>} : vector<2x24xf32>, vector<24x24xf32>, vector<2x24xf32> -> vector<2x24xf32>
    %c240 = arith.constant 240 : index
    %c0_82 = arith.constant 0 : index
    %237 = vector.load %arg3[%c240, %c0_82] : memref<712x128xf32, #tpu.memory_space<vmem>>, vector<1x24xf32>
    %238 = vector.broadcast %237 : vector<1x24xf32> to vector<2x24xf32>
    %239 = arith.addf %236, %238 : vector<2x24xf32>
    %240 = arith.addf %16, %239 : vector<2x24xf32>
    %cst_83 = arith.constant dense<0.000000e+00> : vector<2xf32>
    %241 = vector.multi_reduction <add>, %240, %cst_83 [1] : vector<2x24xf32> to vector<2xf32>
    %242 = vector.shape_cast %241 : vector<2xf32> to vector<2x1xf32>
    %cst_84 = arith.constant 2.400000e+01 : f32
    %243 = vector.broadcast %cst_84 : f32 to vector<2x1xf32>
    %244 = arith.divf %242, %243 : vector<2x1xf32>
    %245 = vector.broadcast %244 : vector<2x1xf32> to vector<2x24xf32>
    %246 = arith.subf %240, %245 : vector<2x24xf32>
    %247 = arith.mulf %246, %246 : vector<2x24xf32>
    %cst_85 = arith.constant dense<0.000000e+00> : vector<2xf32>
    %248 = vector.multi_reduction <add>, %247, %cst_85 [1] : vector<2x24xf32> to vector<2xf32>
    %249 = vector.shape_cast %248 : vector<2xf32> to vector<2x1xf32>
    %cst_86 = arith.constant 2.400000e+01 : f32
    %250 = vector.broadcast %cst_86 : f32 to vector<2x1xf32>
    %251 = arith.divf %249, %250 : vector<2x1xf32>
    %cst_87 = arith.constant 9.99999974E-6 : f32
    %252 = vector.broadcast %cst_87 : f32 to vector<2x1xf32>
    %253 = arith.addf %251, %252 : vector<2x1xf32>
    %254 = math.rsqrt %253 : vector<2x1xf32>
    %255 = vector.broadcast %254 : vector<2x1xf32> to vector<2x24xf32>
    %256 = arith.mulf %246, %255 : vector<2x24xf32>
    %257 = vector.extract_strided_slice %0 {offsets = [3, 0], sizes = [1, 24], strides = [1, 1]} : vector<7x24xf32> to vector<1x24xf32>
    %258 = vector.broadcast %257 : vector<1x24xf32> to vector<2x24xf32>
    %259 = arith.mulf %256, %258 : vector<2x24xf32>
    %260 = vector.extract_strided_slice %1 {offsets = [3, 0], sizes = [1, 24], strides = [1, 1]} : vector<7x24xf32> to vector<1x24xf32>
    %261 = vector.broadcast %260 : vector<1x24xf32> to vector<2x24xf32>
    %262 = arith.addf %259, %261 : vector<2x24xf32>
    %c344 = arith.constant 344 : index
    %c0_88 = arith.constant 0 : index
    %263 = vector.load %arg3[%c344, %c0_88] : memref<712x128xf32, #tpu.memory_space<vmem>>, vector<3x24xf32>
    %c248 = arith.constant 248 : index
    %c0_89 = arith.constant 0 : index
    %264 = vector.load %arg3[%c248, %c0_89] : memref<712x128xf32, #tpu.memory_space<vmem>>, vector<24x24xf32>
    %cst_90 = arith.constant dense<0.000000e+00> : vector<2x24xf32>
    %265 = tpu.matmul %262, %264, %cst_90 {dimension_numbers = #tpu.dot_dimension_numbers<[1], [0], [0], [1], [0, 0, 1, 1], [], []>} : vector<2x24xf32>, vector<24x24xf32>, vector<2x24xf32> -> vector<2x24xf32>
    %266 = vector.extract_strided_slice %263 {offsets = [0, 0], sizes = [1, 24], strides = [1, 1]} : vector<3x24xf32> to vector<1x24xf32>
    %267 = vector.broadcast %266 : vector<1x24xf32> to vector<2x24xf32>
    %268 = arith.addf %265, %267 : vector<2x24xf32>
    %c272 = arith.constant 272 : index
    %c0_91 = arith.constant 0 : index
    %269 = vector.load %arg3[%c272, %c0_91] : memref<712x128xf32, #tpu.memory_space<vmem>>, vector<24x24xf32>
    %cst_92 = arith.constant dense<0.000000e+00> : vector<16x24xf32>
    %270 = tpu.matmul %228, %269, %cst_92 {dimension_numbers = #tpu.dot_dimension_numbers<[1], [0], [0], [1], [0, 0, 1, 1], [], []>} : vector<16x24xf32>, vector<24x24xf32>, vector<16x24xf32> -> vector<16x24xf32>
    %271 = vector.extract_strided_slice %263 {offsets = [1, 0], sizes = [1, 24], strides = [1, 1]} : vector<3x24xf32> to vector<1x24xf32>
    %272 = vector.broadcast %271 : vector<1x24xf32> to vector<16x24xf32>
    %273 = arith.addf %270, %272 : vector<16x24xf32>
    %c296 = arith.constant 296 : index
    %c0_93 = arith.constant 0 : index
    %274 = vector.load %arg3[%c296, %c0_93] : memref<712x128xf32, #tpu.memory_space<vmem>>, vector<24x24xf32>
    %cst_94 = arith.constant dense<0.000000e+00> : vector<16x24xf32>
    %275 = tpu.matmul %228, %274, %cst_94 {dimension_numbers = #tpu.dot_dimension_numbers<[1], [0], [0], [1], [0, 0, 1, 1], [], []>} : vector<16x24xf32>, vector<24x24xf32>, vector<16x24xf32> -> vector<16x24xf32>
    %276 = vector.extract_strided_slice %263 {offsets = [2, 0], sizes = [1, 24], strides = [1, 1]} : vector<3x24xf32> to vector<1x24xf32>
    %277 = vector.broadcast %276 : vector<1x24xf32> to vector<16x24xf32>
    %278 = arith.addf %275, %277 : vector<16x24xf32>
    %279 = vector.extract_strided_slice %268 {offsets = [0, 0], sizes = [1, 24], strides = [1, 1]} : vector<2x24xf32> to vector<1x24xf32>
    %280 = vector.extract_strided_slice %273 {offsets = [0, 0], sizes = [8, 24], strides = [1, 1]} : vector<16x24xf32> to vector<8x24xf32>
    %281 = vector.extract_strided_slice %278 {offsets = [0, 0], sizes = [8, 24], strides = [1, 1]} : vector<16x24xf32> to vector<8x24xf32>
    %282 = vector.extract_strided_slice %279 {offsets = [0, 0], sizes = [1, 8], strides = [1, 1]} : vector<1x24xf32> to vector<1x8xf32>
    %283 = vector.extract_strided_slice %280 {offsets = [0, 0], sizes = [8, 8], strides = [1, 1]} : vector<8x24xf32> to vector<8x8xf32>
    %284 = vector.extract_strided_slice %281 {offsets = [0, 0], sizes = [8, 8], strides = [1, 1]} : vector<8x24xf32> to vector<8x8xf32>
    %cst_95 = arith.constant dense<0.000000e+00> : vector<1x8xf32>
    %285 = tpu.matmul %282, %283, %cst_95 {dimension_numbers = #tpu.dot_dimension_numbers<[1], [1], [0], [0], [0, 0, 1, 0], [], []>} : vector<1x8xf32>, vector<8x8xf32>, vector<1x8xf32> -> vector<1x8xf32>
    %cst_96 = arith.constant 0.353553385 : f32
    %286 = vector.broadcast %cst_96 : f32 to vector<1x8xf32>
    %287 = arith.mulf %285, %286 : vector<1x8xf32>
    %cst_97 = arith.constant dense<0xFF800000> : vector<1xf32>
    %288 = vector.multi_reduction <maximumf>, %287, %cst_97 [1] : vector<1x8xf32> to vector<1xf32>
    %289 = vector.shape_cast %288 : vector<1xf32> to vector<1x1xf32>
    %290 = vector.broadcast %289 : vector<1x1xf32> to vector<1x8xf32>
    %291 = arith.subf %287, %290 : vector<1x8xf32>
    %292 = math.exp %291 : vector<1x8xf32>
    %cst_98 = arith.constant dense<0.000000e+00> : vector<1xf32>
    %293 = vector.multi_reduction <add>, %292, %cst_98 [1] : vector<1x8xf32> to vector<1xf32>
    %294 = vector.shape_cast %293 : vector<1xf32> to vector<1x1xf32>
    %295 = tpu.reciprocal %294 {approx = true} : vector<1x1xf32> -> vector<1x1xf32>
    %296 = vector.broadcast %295 : vector<1x1xf32> to vector<1x8xf32>
    %297 = arith.mulf %292, %296 : vector<1x8xf32>
    %cst_99 = arith.constant dense<0.000000e+00> : vector<1x8xf32>
    %298 = tpu.matmul %297, %284, %cst_99 {dimension_numbers = #tpu.dot_dimension_numbers<[1], [0], [0], [1], [0, 0, 1, 1], [], []>} : vector<1x8xf32>, vector<8x8xf32>, vector<1x8xf32> -> vector<1x8xf32>
    %299 = vector.extract_strided_slice %279 {offsets = [0, 8], sizes = [1, 8], strides = [1, 1]} : vector<1x24xf32> to vector<1x8xf32>
    %300 = vector.extract_strided_slice %280 {offsets = [0, 8], sizes = [8, 8], strides = [1, 1]} : vector<8x24xf32> to vector<8x8xf32>
    %301 = vector.extract_strided_slice %281 {offsets = [0, 8], sizes = [8, 8], strides = [1, 1]} : vector<8x24xf32> to vector<8x8xf32>
    %cst_100 = arith.constant dense<0.000000e+00> : vector<1x8xf32>
    %302 = tpu.matmul %299, %300, %cst_100 {dimension_numbers = #tpu.dot_dimension_numbers<[1], [1], [0], [0], [0, 0, 1, 0], [], []>} : vector<1x8xf32>, vector<8x8xf32>, vector<1x8xf32> -> vector<1x8xf32>
    %cst_101 = arith.constant 0.353553385 : f32
    %303 = vector.broadcast %cst_101 : f32 to vector<1x8xf32>
    %304 = arith.mulf %302, %303 : vector<1x8xf32>
    %cst_102 = arith.constant dense<0xFF800000> : vector<1xf32>
    %305 = vector.multi_reduction <maximumf>, %304, %cst_102 [1] : vector<1x8xf32> to vector<1xf32>
    %306 = vector.shape_cast %305 : vector<1xf32> to vector<1x1xf32>
    %307 = vector.broadcast %306 : vector<1x1xf32> to vector<1x8xf32>
    %308 = arith.subf %304, %307 : vector<1x8xf32>
    %309 = math.exp %308 : vector<1x8xf32>
    %cst_103 = arith.constant dense<0.000000e+00> : vector<1xf32>
    %310 = vector.multi_reduction <add>, %309, %cst_103 [1] : vector<1x8xf32> to vector<1xf32>
    %311 = vector.shape_cast %310 : vector<1xf32> to vector<1x1xf32>
    %312 = tpu.reciprocal %311 {approx = true} : vector<1x1xf32> -> vector<1x1xf32>
    %313 = vector.broadcast %312 : vector<1x1xf32> to vector<1x8xf32>
    %314 = arith.mulf %309, %313 : vector<1x8xf32>
    %cst_104 = arith.constant dense<0.000000e+00> : vector<1x8xf32>
    %315 = tpu.matmul %314, %301, %cst_104 {dimension_numbers = #tpu.dot_dimension_numbers<[1], [0], [0], [1], [0, 0, 1, 1], [], []>} : vector<1x8xf32>, vector<8x8xf32>, vector<1x8xf32> -> vector<1x8xf32>
    %316 = vector.extract_strided_slice %279 {offsets = [0, 16], sizes = [1, 8], strides = [1, 1]} : vector<1x24xf32> to vector<1x8xf32>
    %317 = vector.extract_strided_slice %280 {offsets = [0, 16], sizes = [8, 8], strides = [1, 1]} : vector<8x24xf32> to vector<8x8xf32>
    %318 = vector.extract_strided_slice %281 {offsets = [0, 16], sizes = [8, 8], strides = [1, 1]} : vector<8x24xf32> to vector<8x8xf32>
    %cst_105 = arith.constant dense<0.000000e+00> : vector<1x8xf32>
    %319 = tpu.matmul %316, %317, %cst_105 {dimension_numbers = #tpu.dot_dimension_numbers<[1], [1], [0], [0], [0, 0, 1, 0], [], []>} : vector<1x8xf32>, vector<8x8xf32>, vector<1x8xf32> -> vector<1x8xf32>
    %cst_106 = arith.constant 0.353553385 : f32
    %320 = vector.broadcast %cst_106 : f32 to vector<1x8xf32>
    %321 = arith.mulf %319, %320 : vector<1x8xf32>
    %cst_107 = arith.constant dense<0xFF800000> : vector<1xf32>
    %322 = vector.multi_reduction <maximumf>, %321, %cst_107 [1] : vector<1x8xf32> to vector<1xf32>
    %323 = vector.shape_cast %322 : vector<1xf32> to vector<1x1xf32>
    %324 = vector.broadcast %323 : vector<1x1xf32> to vector<1x8xf32>
    %325 = arith.subf %321, %324 : vector<1x8xf32>
    %326 = math.exp %325 : vector<1x8xf32>
    %cst_108 = arith.constant dense<0.000000e+00> : vector<1xf32>
    %327 = vector.multi_reduction <add>, %326, %cst_108 [1] : vector<1x8xf32> to vector<1xf32>
    %328 = vector.shape_cast %327 : vector<1xf32> to vector<1x1xf32>
    %329 = tpu.reciprocal %328 {approx = true} : vector<1x1xf32> -> vector<1x1xf32>
    %330 = vector.broadcast %329 : vector<1x1xf32> to vector<1x8xf32>
    %331 = arith.mulf %326, %330 : vector<1x8xf32>
    %cst_109 = arith.constant dense<0.000000e+00> : vector<1x8xf32>
    %332 = tpu.matmul %331, %318, %cst_109 {dimension_numbers = #tpu.dot_dimension_numbers<[1], [0], [0], [1], [0, 0, 1, 1], [], []>} : vector<1x8xf32>, vector<8x8xf32>, vector<1x8xf32> -> vector<1x8xf32>
    %333 = tpu.concatenate %298, %315, %332 in 1 : vector<1x8xf32>, vector<1x8xf32>, vector<1x8xf32> -> vector<1x24xf32>
    %334 = vector.extract_strided_slice %268 {offsets = [1, 0], sizes = [1, 24], strides = [1, 1]} : vector<2x24xf32> to vector<1x24xf32>
    %335 = vector.extract_strided_slice %273 {offsets = [8, 0], sizes = [8, 24], strides = [1, 1]} : vector<16x24xf32> to vector<8x24xf32>
    %336 = vector.extract_strided_slice %278 {offsets = [8, 0], sizes = [8, 24], strides = [1, 1]} : vector<16x24xf32> to vector<8x24xf32>
    %337 = vector.extract_strided_slice %334 {offsets = [0, 0], sizes = [1, 8], strides = [1, 1]} : vector<1x24xf32> to vector<1x8xf32>
    %338 = vector.extract_strided_slice %335 {offsets = [0, 0], sizes = [8, 8], strides = [1, 1]} : vector<8x24xf32> to vector<8x8xf32>
    %339 = vector.extract_strided_slice %336 {offsets = [0, 0], sizes = [8, 8], strides = [1, 1]} : vector<8x24xf32> to vector<8x8xf32>
    %cst_110 = arith.constant dense<0.000000e+00> : vector<1x8xf32>
    %340 = tpu.matmul %337, %338, %cst_110 {dimension_numbers = #tpu.dot_dimension_numbers<[1], [1], [0], [0], [0, 0, 1, 0], [], []>} : vector<1x8xf32>, vector<8x8xf32>, vector<1x8xf32> -> vector<1x8xf32>
    %cst_111 = arith.constant 0.353553385 : f32
    %341 = vector.broadcast %cst_111 : f32 to vector<1x8xf32>
    %342 = arith.mulf %340, %341 : vector<1x8xf32>
    %cst_112 = arith.constant dense<0xFF800000> : vector<1xf32>
    %343 = vector.multi_reduction <maximumf>, %342, %cst_112 [1] : vector<1x8xf32> to vector<1xf32>
    %344 = vector.shape_cast %343 : vector<1xf32> to vector<1x1xf32>
    %345 = vector.broadcast %344 : vector<1x1xf32> to vector<1x8xf32>
    %346 = arith.subf %342, %345 : vector<1x8xf32>
    %347 = math.exp %346 : vector<1x8xf32>
    %cst_113 = arith.constant dense<0.000000e+00> : vector<1xf32>
    %348 = vector.multi_reduction <add>, %347, %cst_113 [1] : vector<1x8xf32> to vector<1xf32>
    %349 = vector.shape_cast %348 : vector<1xf32> to vector<1x1xf32>
    %350 = tpu.reciprocal %349 {approx = true} : vector<1x1xf32> -> vector<1x1xf32>
    %351 = vector.broadcast %350 : vector<1x1xf32> to vector<1x8xf32>
    %352 = arith.mulf %347, %351 : vector<1x8xf32>
    %cst_114 = arith.constant dense<0.000000e+00> : vector<1x8xf32>
    %353 = tpu.matmul %352, %339, %cst_114 {dimension_numbers = #tpu.dot_dimension_numbers<[1], [0], [0], [1], [0, 0, 1, 1], [], []>} : vector<1x8xf32>, vector<8x8xf32>, vector<1x8xf32> -> vector<1x8xf32>
    %354 = vector.extract_strided_slice %334 {offsets = [0, 8], sizes = [1, 8], strides = [1, 1]} : vector<1x24xf32> to vector<1x8xf32>
    %355 = vector.extract_strided_slice %335 {offsets = [0, 8], sizes = [8, 8], strides = [1, 1]} : vector<8x24xf32> to vector<8x8xf32>
    %356 = vector.extract_strided_slice %336 {offsets = [0, 8], sizes = [8, 8], strides = [1, 1]} : vector<8x24xf32> to vector<8x8xf32>
    %cst_115 = arith.constant dense<0.000000e+00> : vector<1x8xf32>
    %357 = tpu.matmul %354, %355, %cst_115 {dimension_numbers = #tpu.dot_dimension_numbers<[1], [1], [0], [0], [0, 0, 1, 0], [], []>} : vector<1x8xf32>, vector<8x8xf32>, vector<1x8xf32> -> vector<1x8xf32>
    %cst_116 = arith.constant 0.353553385 : f32
    %358 = vector.broadcast %cst_116 : f32 to vector<1x8xf32>
    %359 = arith.mulf %357, %358 : vector<1x8xf32>
    %cst_117 = arith.constant dense<0xFF800000> : vector<1xf32>
    %360 = vector.multi_reduction <maximumf>, %359, %cst_117 [1] : vector<1x8xf32> to vector<1xf32>
    %361 = vector.shape_cast %360 : vector<1xf32> to vector<1x1xf32>
    %362 = vector.broadcast %361 : vector<1x1xf32> to vector<1x8xf32>
    %363 = arith.subf %359, %362 : vector<1x8xf32>
    %364 = math.exp %363 : vector<1x8xf32>
    %cst_118 = arith.constant dense<0.000000e+00> : vector<1xf32>
    %365 = vector.multi_reduction <add>, %364, %cst_118 [1] : vector<1x8xf32> to vector<1xf32>
    %366 = vector.shape_cast %365 : vector<1xf32> to vector<1x1xf32>
    %367 = tpu.reciprocal %366 {approx = true} : vector<1x1xf32> -> vector<1x1xf32>
    %368 = vector.broadcast %367 : vector<1x1xf32> to vector<1x8xf32>
    %369 = arith.mulf %364, %368 : vector<1x8xf32>
    %cst_119 = arith.constant dense<0.000000e+00> : vector<1x8xf32>
    %370 = tpu.matmul %369, %356, %cst_119 {dimension_numbers = #tpu.dot_dimension_numbers<[1], [0], [0], [1], [0, 0, 1, 1], [], []>} : vector<1x8xf32>, vector<8x8xf32>, vector<1x8xf32> -> vector<1x8xf32>
    %371 = vector.extract_strided_slice %334 {offsets = [0, 16], sizes = [1, 8], strides = [1, 1]} : vector<1x24xf32> to vector<1x8xf32>
    %372 = vector.extract_strided_slice %335 {offsets = [0, 16], sizes = [8, 8], strides = [1, 1]} : vector<8x24xf32> to vector<8x8xf32>
    %373 = vector.extract_strided_slice %336 {offsets = [0, 16], sizes = [8, 8], strides = [1, 1]} : vector<8x24xf32> to vector<8x8xf32>
    %cst_120 = arith.constant dense<0.000000e+00> : vector<1x8xf32>
    %374 = tpu.matmul %371, %372, %cst_120 {dimension_numbers = #tpu.dot_dimension_numbers<[1], [1], [0], [0], [0, 0, 1, 0], [], []>} : vector<1x8xf32>, vector<8x8xf32>, vector<1x8xf32> -> vector<1x8xf32>
    %cst_121 = arith.constant 0.353553385 : f32
    %375 = vector.broadcast %cst_121 : f32 to vector<1x8xf32>
    %376 = arith.mulf %374, %375 : vector<1x8xf32>
    %cst_122 = arith.constant dense<0xFF800000> : vector<1xf32>
    %377 = vector.multi_reduction <maximumf>, %376, %cst_122 [1] : vector<1x8xf32> to vector<1xf32>
    %378 = vector.shape_cast %377 : vector<1xf32> to vector<1x1xf32>
    %379 = vector.broadcast %378 : vector<1x1xf32> to vector<1x8xf32>
    %380 = arith.subf %376, %379 : vector<1x8xf32>
    %381 = math.exp %380 : vector<1x8xf32>
    %cst_123 = arith.constant dense<0.000000e+00> : vector<1xf32>
    %382 = vector.multi_reduction <add>, %381, %cst_123 [1] : vector<1x8xf32> to vector<1xf32>
    %383 = vector.shape_cast %382 : vector<1xf32> to vector<1x1xf32>
    %384 = tpu.reciprocal %383 {approx = true} : vector<1x1xf32> -> vector<1x1xf32>
    %385 = vector.broadcast %384 : vector<1x1xf32> to vector<1x8xf32>
    %386 = arith.mulf %381, %385 : vector<1x8xf32>
    %cst_124 = arith.constant dense<0.000000e+00> : vector<1x8xf32>
    %387 = tpu.matmul %386, %373, %cst_124 {dimension_numbers = #tpu.dot_dimension_numbers<[1], [0], [0], [1], [0, 0, 1, 1], [], []>} : vector<1x8xf32>, vector<8x8xf32>, vector<1x8xf32> -> vector<1x8xf32>
    %388 = tpu.concatenate %353, %370, %387 in 1 : vector<1x8xf32>, vector<1x8xf32>, vector<1x8xf32> -> vector<1x24xf32>
    %389 = tpu.concatenate %333, %388 in 0 : vector<1x24xf32>, vector<1x24xf32> -> vector<2x24xf32>
    %c320 = arith.constant 320 : index
    %c0_125 = arith.constant 0 : index
    %390 = vector.load %arg3[%c320, %c0_125] : memref<712x128xf32, #tpu.memory_space<vmem>>, vector<24x24xf32>
    %cst_126 = arith.constant dense<0.000000e+00> : vector<2x24xf32>
    %391 = tpu.matmul %389, %390, %cst_126 {dimension_numbers = #tpu.dot_dimension_numbers<[1], [0], [0], [1], [0, 0, 1, 1], [], []>} : vector<2x24xf32>, vector<24x24xf32>, vector<2x24xf32> -> vector<2x24xf32>
    %c352 = arith.constant 352 : index
    %c0_127 = arith.constant 0 : index
    %392 = vector.load %arg3[%c352, %c0_127] : memref<712x128xf32, #tpu.memory_space<vmem>>, vector<1x24xf32>
    %393 = vector.broadcast %392 : vector<1x24xf32> to vector<2x24xf32>
    %394 = arith.addf %391, %393 : vector<2x24xf32>
    %395 = arith.addf %262, %394 : vector<2x24xf32>
    %cst_128 = arith.constant dense<0.000000e+00> : vector<2xf32>
    %396 = vector.multi_reduction <add>, %395, %cst_128 [1] : vector<2x24xf32> to vector<2xf32>
    %397 = vector.shape_cast %396 : vector<2xf32> to vector<2x1xf32>
    %cst_129 = arith.constant 2.400000e+01 : f32
    %398 = vector.broadcast %cst_129 : f32 to vector<2x1xf32>
    %399 = arith.divf %397, %398 : vector<2x1xf32>
    %400 = vector.broadcast %399 : vector<2x1xf32> to vector<2x24xf32>
    %401 = arith.subf %395, %400 : vector<2x24xf32>
    %402 = arith.mulf %401, %401 : vector<2x24xf32>
    %cst_130 = arith.constant dense<0.000000e+00> : vector<2xf32>
    %403 = vector.multi_reduction <add>, %402, %cst_130 [1] : vector<2x24xf32> to vector<2xf32>
    %404 = vector.shape_cast %403 : vector<2xf32> to vector<2x1xf32>
    %cst_131 = arith.constant 2.400000e+01 : f32
    %405 = vector.broadcast %cst_131 : f32 to vector<2x1xf32>
    %406 = arith.divf %404, %405 : vector<2x1xf32>
    %cst_132 = arith.constant 9.99999974E-6 : f32
    %407 = vector.broadcast %cst_132 : f32 to vector<2x1xf32>
    %408 = arith.addf %406, %407 : vector<2x1xf32>
    %409 = math.rsqrt %408 : vector<2x1xf32>
    %410 = vector.broadcast %409 : vector<2x1xf32> to vector<2x24xf32>
    %411 = arith.mulf %401, %410 : vector<2x24xf32>
    %412 = vector.extract_strided_slice %0 {offsets = [4, 0], sizes = [1, 24], strides = [1, 1]} : vector<7x24xf32> to vector<1x24xf32>
    %413 = vector.broadcast %412 : vector<1x24xf32> to vector<2x24xf32>
    %414 = arith.mulf %411, %413 : vector<2x24xf32>
    %415 = vector.extract_strided_slice %1 {offsets = [4, 0], sizes = [1, 24], strides = [1, 1]} : vector<7x24xf32> to vector<1x24xf32>
    %416 = vector.broadcast %415 : vector<1x24xf32> to vector<2x24xf32>
    %417 = arith.addf %414, %416 : vector<2x24xf32>
    %c528 = arith.constant 528 : index
    %c0_133 = arith.constant 0 : index
    %418 = vector.load %arg3[%c528, %c0_133] : memref<712x128xf32, #tpu.memory_space<vmem>>, vector<24x128xf32>
    %cst_134 = arith.constant dense<0.000000e+00> : vector<2x128xf32>
    %419 = tpu.matmul %417, %418, %cst_134 {dimension_numbers = #tpu.dot_dimension_numbers<[1], [0], [0], [1], [0, 0, 1, 1], [], []>} : vector<2x24xf32>, vector<24x128xf32>, vector<2x128xf32> -> vector<2x128xf32>
    %c552 = arith.constant 552 : index
    %c0_135 = arith.constant 0 : index
    %420 = vector.load %arg3[%c552, %c0_135] : memref<712x128xf32, #tpu.memory_space<vmem>>, vector<1x128xf32>
    %421 = vector.broadcast %420 : vector<1x128xf32> to vector<2x128xf32>
    %422 = arith.addf %419, %421 : vector<2x128xf32>
    %cst_136 = arith.constant 0.000000e+00 : f32
    %423 = vector.broadcast %cst_136 : f32 to vector<2x128xf32>
    %424 = arith.maximumf %422, %423 : vector<2x128xf32>
    %c560 = arith.constant 560 : index
    %c0_137 = arith.constant 0 : index
    %425 = vector.load %arg3[%c560, %c0_137] : memref<712x128xf32, #tpu.memory_space<vmem>>, vector<128x24xf32>
    %cst_138 = arith.constant dense<0.000000e+00> : vector<2x24xf32>
    %426 = tpu.matmul %424, %425, %cst_138 {dimension_numbers = #tpu.dot_dimension_numbers<[1], [0], [0], [1], [0, 0, 1, 1], [], []>} : vector<2x128xf32>, vector<128x24xf32>, vector<2x24xf32> -> vector<2x24xf32>
    %c688 = arith.constant 688 : index
    %c0_139 = arith.constant 0 : index
    %427 = vector.load %arg3[%c688, %c0_139] : memref<712x128xf32, #tpu.memory_space<vmem>>, vector<1x24xf32>
    %428 = vector.broadcast %427 : vector<1x24xf32> to vector<2x24xf32>
    %429 = arith.addf %426, %428 : vector<2x24xf32>
    %430 = arith.addf %417, %429 : vector<2x24xf32>
    %cst_140 = arith.constant dense<0.000000e+00> : vector<2xf32>
    %431 = vector.multi_reduction <add>, %430, %cst_140 [1] : vector<2x24xf32> to vector<2xf32>
    %432 = vector.shape_cast %431 : vector<2xf32> to vector<2x1xf32>
    %cst_141 = arith.constant 2.400000e+01 : f32
    %433 = vector.broadcast %cst_141 : f32 to vector<2x1xf32>
    %434 = arith.divf %432, %433 : vector<2x1xf32>
    %435 = vector.broadcast %434 : vector<2x1xf32> to vector<2x24xf32>
    %436 = arith.subf %430, %435 : vector<2x24xf32>
    %437 = arith.mulf %436, %436 : vector<2x24xf32>
    %cst_142 = arith.constant dense<0.000000e+00> : vector<2xf32>
    %438 = vector.multi_reduction <add>, %437, %cst_142 [1] : vector<2x24xf32> to vector<2xf32>
    %439 = vector.shape_cast %438 : vector<2xf32> to vector<2x1xf32>
    %cst_143 = arith.constant 2.400000e+01 : f32
    %440 = vector.broadcast %cst_143 : f32 to vector<2x1xf32>
    %441 = arith.divf %439, %440 : vector<2x1xf32>
    %cst_144 = arith.constant 9.99999974E-6 : f32
    %442 = vector.broadcast %cst_144 : f32 to vector<2x1xf32>
    %443 = arith.addf %441, %442 : vector<2x1xf32>
    %444 = math.rsqrt %443 : vector<2x1xf32>
    %445 = vector.broadcast %444 : vector<2x1xf32> to vector<2x24xf32>
    %446 = arith.mulf %436, %445 : vector<2x24xf32>
    %447 = vector.extract_strided_slice %0 {offsets = [5, 0], sizes = [1, 24], strides = [1, 1]} : vector<7x24xf32> to vector<1x24xf32>
    %448 = vector.broadcast %447 : vector<1x24xf32> to vector<2x24xf32>
    %449 = arith.mulf %446, %448 : vector<2x24xf32>
    %450 = vector.extract_strided_slice %1 {offsets = [5, 0], sizes = [1, 24], strides = [1, 1]} : vector<7x24xf32> to vector<1x24xf32>
    %451 = vector.broadcast %450 : vector<1x24xf32> to vector<2x24xf32>
    %452 = arith.addf %449, %451 : vector<2x24xf32>
    %cst_145 = arith.constant dense<0.000000e+00> : vector<2xf32>
    %453 = vector.multi_reduction <add>, %452, %cst_145 [1] : vector<2x24xf32> to vector<2xf32>
    %454 = vector.shape_cast %453 : vector<2xf32> to vector<2x1xf32>
    %cst_146 = arith.constant 2.400000e+01 : f32
    %455 = vector.broadcast %cst_146 : f32 to vector<2x1xf32>
    %456 = arith.divf %454, %455 : vector<2x1xf32>
    %457 = vector.broadcast %456 : vector<2x1xf32> to vector<2x24xf32>
    %458 = arith.subf %452, %457 : vector<2x24xf32>
    %459 = arith.mulf %458, %458 : vector<2x24xf32>
    %cst_147 = arith.constant dense<0.000000e+00> : vector<2xf32>
    %460 = vector.multi_reduction <add>, %459, %cst_147 [1] : vector<2x24xf32> to vector<2xf32>
    %461 = vector.shape_cast %460 : vector<2xf32> to vector<2x1xf32>
    %cst_148 = arith.constant 2.400000e+01 : f32
    %462 = vector.broadcast %cst_148 : f32 to vector<2x1xf32>
    %463 = arith.divf %461, %462 : vector<2x1xf32>
    %cst_149 = arith.constant 9.99999974E-6 : f32
    %464 = vector.broadcast %cst_149 : f32 to vector<2x1xf32>
    %465 = arith.addf %463, %464 : vector<2x1xf32>
    %466 = math.rsqrt %465 : vector<2x1xf32>
    %467 = vector.broadcast %466 : vector<2x1xf32> to vector<2x24xf32>
    %468 = arith.mulf %458, %467 : vector<2x24xf32>
    %469 = vector.extract_strided_slice %0 {offsets = [6, 0], sizes = [1, 24], strides = [1, 1]} : vector<7x24xf32> to vector<1x24xf32>
    %470 = vector.broadcast %469 : vector<1x24xf32> to vector<2x24xf32>
    %471 = arith.mulf %468, %470 : vector<2x24xf32>
    %472 = vector.extract_strided_slice %1 {offsets = [6, 0], sizes = [1, 24], strides = [1, 1]} : vector<7x24xf32> to vector<1x24xf32>
    %473 = vector.broadcast %472 : vector<1x24xf32> to vector<2x24xf32>
    %474 = arith.addf %471, %473 : vector<2x24xf32>
    %475 = vector.extract_strided_slice %474 {offsets = [0, 0], sizes = [1, 24], strides = [1, 1]} : vector<2x24xf32> to vector<1x24xf32>
    %c0_150 = arith.constant 0 : index
    %c0_151 = arith.constant 0 : index
    %c0_152 = arith.constant 0 : index
    %476 = vector.load %arg4[%c0_150, %c0_151, %c0_152] : memref<2x1x24xf32, #tpu.memory_space<vmem>>, vector<1x1x24xf32>
    %477 = vector.shape_cast %476 : vector<1x1x24xf32> to vector<1x24xf32>
    %478 = vector.shape_cast %475 : vector<1x24xf32> to vector<1x1x24xf32>
    tpu.vector_store %arg4[%c0_150, %c0_151, %c0_152], %478 {strides = array<i32>} : memref<2x1x24xf32, #tpu.memory_space<vmem>>, vector<1x1x24xf32>,
    %479 = vector.extract_strided_slice %474 {offsets = [1, 0], sizes = [1, 24], strides = [1, 1]} : vector<2x24xf32> to vector<1x24xf32>
    %c1_153 = arith.constant 1 : index
    %c0_154 = arith.constant 0 : index
    %c0_155 = arith.constant 0 : index
    %480 = vector.load %arg4[%c1_153, %c0_154, %c0_155] : memref<2x1x24xf32, #tpu.memory_space<vmem>>, vector<1x1x24xf32>
    %481 = vector.shape_cast %480 : vector<1x1x24xf32> to vector<1x24xf32>
    %482 = vector.shape_cast %479 : vector<1x24xf32> to vector<1x1x24xf32>
    tpu.vector_store %arg4[%c1_153, %c0_154, %c0_155], %482 {strides = array<i32>} : memref<2x1x24xf32, #tpu.memory_space<vmem>>, vector<1x1x24xf32>,
    return
  }
  func.func @transform_0(%arg0: i32) -> (i32, i32, i32) {
    %c0_i32 = arith.constant 0 : i32
    %c0_i32_0 = arith.constant 0 : i32
    %c0_i32_1 = arith.constant 0 : i32
    return %arg0, %c0_i32, %c0_i32_0 : i32, i32, i32
  }
  func.func @transform_1(%arg0: i32) -> (i32, i32, i32) {
    %c0_i32 = arith.constant 0 : i32
    %c0_i32_0 = arith.constant 0 : i32
    %c0_i32_1 = arith.constant 0 : i32
    return %arg0, %c0_i32, %c0_i32_0 : i32, i32, i32
  }
  func.func @transform_2(%arg0: i32) -> (i32, i32) {
    %c0_i32 = arith.constant 0 : i32
    %c0_i32_0 = arith.constant 0 : i32
    %c0_i32_1 = arith.constant 0 : i32
    return %c0_i32, %c0_i32_0 : i32, i32
  }
  func.func @transform_3(%arg0: i32) -> (i32, i32, i32) {
    %c0_i32 = arith.constant 0 : i32
    %c0_i32_0 = arith.constant 0 : i32
    %c0_i32_1 = arith.constant 0 : i32
    return %arg0, %c0_i32, %c0_i32_0 : i32, i32, i32
  }
}

</mosaic_0001>

<llo_original>
// kernel: tpu_custom_call.1
$region0: #{tpu_custom_call.1}
  #allocation0 [shape = 'u32[]', space=smem, size = 0x4, offset = 0x4, fixed_abs, tag = 'smem constant byte address 0x4 - core index']
  #allocation1 [shape = 'u32[72,128]{1,0:T(1,128)}', space=vmem, size = 0x9000, scoped, tag = 'internal scratch']
  %s0 = inlined_call_operand.hbm [shape: f32[2,1,16], index: 0, kind: input, shape index: {}]
  %s1 = inlined_call_operand.hbm [shape: f32[2,8,24], index: 1, kind: input, shape index: {}]
  %s2 = inlined_call_operand.hbm [shape: f32[712,128], index: 2, kind: input, shape index: {}]
  %s3 = inlined_call_operand.hbm [shape: f32[2,1,24], index: 3, kind: output, shape index: {}]
  %s4 = sld [smem:[#allocation0]]
  $region34: #{tpu_custom_call.1} parent=0
    _
  %s6 = ssub.s32 1, %s4
  %s7 = scalar_select 0, %s6, %s4
  $region1: #{tpu_custom_call.1} parent=0
    #allocation2 [shape = 'u8[1024]{0}', space=vmem, size = 0x400, scoped, tag = 'input window, operand 0, single buffered']
    #allocation3 [shape = 's32[1]{0}', space=sflag, size = 0x4, scoped, tag = 'scoped memory for tpu_custom_call.1']
    #allocation4 [shape = 's32[1]{0}', space=sflag, size = 0x4, scoped, tag = 'scoped memory for tpu_custom_call.1']
    #allocation5 [shape = 'u8[8192]{0}', space=vmem, size = 0x2000, scoped, tag = 'input window, operand 1, single buffered']
    #allocation6 [shape = 's32[1]{0}', space=sflag, size = 0x4, scoped, tag = 'scoped memory for tpu_custom_call.1']
    #allocation7 [shape = 'u8[364544]{0}', space=vmem, size = 0x59000, scoped, tag = 'input window, operand 2, single buffered']
    #allocation8 [shape = 'u8[1024]{0}', space=vmem, size = 0x400, scoped, tag = 'output window, operand 0, single buffered']
    %8 = vsyncpa [#allocation3], 0
    %9 = vsyncpa [#allocation6], 0
    %10 = vsyncpa [#allocation4], 0
    // Predicated region
    $region2: #{tpu_custom_call.1} parent=1 // pred_check
      _
    $region3: #{tpu_custom_call.1} parent=1 // pred_check_branch
      %12 = sbr.rel (0) target = $region5
    $region4: #{tpu_custom_call.1} parent=1 // pred_region
      %14 = vsyncadd [#allocation3], 0
      %s15 = sshll.u32 %s0, 4
      %s16 = int_to_ptr.hbm [resolvable:$true] %s15
      %s17 = sshll.u32 [#allocation2], 4
      %s18 = int_to_ptr.vmem [resolvable:$true] %s17
      %23 = dma.hbm_to_vmem [thread:$0]  %s16, 32, %s18, [#allocation3], 16, 16, 1
    $region5: #{tpu_custom_call.1} parent=1 // pred_fallthru
      _
    // Predicated region
    $region6: #{tpu_custom_call.1} parent=1 // pred_check
      _
    $region7: #{tpu_custom_call.1} parent=1 // pred_check_branch
      %25 = sbr.rel (0) target = $region9
    $region8: #{tpu_custom_call.1} parent=1 // pred_region
      %27 = vsyncadd [#allocation6], 0
      %s28 = sshll.u32 %s1, 4
      %s29 = int_to_ptr.hbm [resolvable:$true] %s28
      %s30 = sshll.u32 [#allocation5], 4
      %s31 = int_to_ptr.vmem [resolvable:$true] %s30
      %36 = dma.hbm_to_vmem [thread:$0]  %s29, 256, %s31, [#allocation6], 128, 128, 8
    $region9: #{tpu_custom_call.1} parent=1 // pred_fallthru
      _
    // Predicated region
    $region10: #{tpu_custom_call.1} parent=1 // pred_check
      _
    $region11: #{tpu_custom_call.1} parent=1 // pred_check_branch
      %38 = sbr.rel (0) target = $region13
    $region12: #{tpu_custom_call.1} parent=1 // pred_region
      %40 = vsyncadd [#allocation6], 0
      %s41 = sshll.u32 %s2, 4
      %s42 = int_to_ptr.hbm [resolvable:$true] %s41
      %s43 = sshll.u32 [#allocation7], 4
      %s44 = int_to_ptr.vmem [resolvable:$true] %s43
      %49 = dma.hbm_to_vmem [thread:$0]  %s42, 11392, %s44, [#allocation6], 128, 128, 8
    $region13: #{tpu_custom_call.1} parent=1 // pred_fallthru
      _
    // Predicated region
    $region14: #{tpu_custom_call.1} parent=1 // pred_check
      _
    $region15: #{tpu_custom_call.1} parent=1 // pred_check_branch
      %51 = sbr.rel (0) target = $region17
    $region16: #{tpu_custom_call.1} parent=1 // pred_region
      %53 = dma.done [#allocation3], 32
    $region17: #{tpu_custom_call.1} parent=1 // pred_fallthru
      _
    // Predicated region
    $region18: #{tpu_custom_call.1} parent=1 // pred_check
      _
    $region19: #{tpu_custom_call.1} parent=1 // pred_check_branch
      %55 = sbr.rel (0) target = $region21
    $region20: #{tpu_custom_call.1} parent=1 // pred_region
      %57 = dma.done [#allocation6], 256
    $region21: #{tpu_custom_call.1} parent=1 // pred_fallthru
      _
    // Predicated region
    $region22: #{tpu_custom_call.1} parent=1 // pred_check
      _
    $region23: #{tpu_custom_call.1} parent=1 // pred_check_branch
      %59 = sbr.rel (0) target = $region25
    $region24: #{tpu_custom_call.1} parent=1 // pred_region
      %61 = dma.done [#allocation6], 11392
    $region25: #{tpu_custom_call.1} parent=1 // pred_fallthru
      _
    %v62 = vld [vmem:[#allocation7 + $0x2b8] sm:$0x7f]
    %v63 = vld [vmem:[#allocation7 + $0x2c0] sm:$0x7f]
    %v64 = vld [vmem:[#allocation5] sm:$0xff]
    %s65 = scalar_lea.vmem [#allocation5], 8
    %v66 = vld [vmem:[%s65] sm:$0xff]
    %v67 = vld [vmem:[#allocation2] sm:$0x1]
    %s68 = scalar_lea.vmem [#allocation2], 1
    %v69 = vld [vmem:[%s68] sm:$0x1]
    %v71 = vperm.slane %v69, 0
    %vm73 = vcmask 1040384
    %v74 = vsel %vm73, %v67, %v71
    %v75 = vld [vmem:[#allocation7] sm:$0xff]
    %v76 = vld [vmem:[#allocation7 + $0x8] sm:$0xff]
    %v77 = vld [vmem:[#allocation7 + $0x10] sm:$0x1]
    %v78 = vperm.slane %v77, 0
    %vm79 = vcmask 130048
    %v81 = vsel %vm79, %v74, 0
    %83 = vmatpush.msra.mxu0 0.0
    %84 = vmatpush.msra.mxu0 0.0
    %85 = vmatpush.msra.mxu0 0.0
    %86 = vmatpush.msra.mxu0 0.0
    %87 = vmatpush.msra.mxu0 0.0
    %88 = vmatpush.msra.mxu0 0.0
    %89 = vmatpush.msra.mxu0 0.0
    %90 = vmatpush.msra.mxu0 0.0
    %91 = vmatpush.msra.mxu0 0.0
    %92 = vmatpush.msra.mxu0 0.0
    %93 = vmatpush.msra.mxu0 0.0
    %94 = vmatpush.msra.mxu0 0.0
    %95 = vmatpush.msra.mxu0 0.0
    %96 = vmatpush.msra.mxu0 0.0
    %97 = vmatpush.msra.mxu0 %v76
    %98 = vmatpush.msra.mxu0 %v75
    %99 = vmatmul.f32.gmra.mxu0 %v81
    %v100 = vpop.f32.mrf.mxu0
    %v101 = vadd.f32 %v78, %v100
    %102 = vdwg.mxu0
    %v103 = vld [vmem:[#allocation7 + $0x78] sm:$0x7]
    %v104 = vld [vmem:[#allocation7 + $0x18] sm:$0xff]
    %v105 = vld [vmem:[#allocation7 + $0x20] sm:$0xff]
    %v106 = vld [vmem:[#allocation7 + $0x28] sm:$0xff]
    %v107 = vperm.slane %v103, 0
    %vm108 = vcmask 195584
    %v110 = vsel %vm108, %v64, 0
    %v113 = vsel %vm108, %v66, 0
    %115 = vmatpush.msra.mxu0 0.0
    %116 = vmatpush.msra.mxu0 0.0
    %117 = vmatpush.msra.mxu0 0.0
    %118 = vmatpush.msra.mxu0 0.0
    %119 = vmatpush.msra.mxu0 0.0
    %120 = vmatpush.msra.mxu0 0.0
    %121 = vmatpush.msra.mxu0 0.0
    %122 = vmatpush.msra.mxu0 0.0
    %123 = vmatpush.msra.mxu0 0.0
    %124 = vmatpush.msra.mxu0 0.0
    %125 = vmatpush.msra.mxu0 0.0
    %126 = vmatpush.msra.mxu0 0.0
    %127 = vmatpush.msra.mxu0 0.0
    %128 = vmatpush.msra.mxu0 %v106
    %129 = vmatpush.msra.mxu0 %v105
    %130 = vmatpush.msra.mxu0 %v104
    %131 = vmatmul.f32.gmra.mxu0 %v110
    %v132 = vpop.f32.mrf.mxu0
    %v133 = vadd.f32 %v107, %v132
    %134 = vmatmul.f32.gmra.mxu0 %v113
    %v135 = vpop.f32.mrf.mxu0
    %v136 = vadd.f32 %v107, %v135
    %137 = vdwg.mxu0
    %v138 = vld [vmem:[#allocation7 + $0x30] sm:$0xff]
    %v139 = vld [vmem:[#allocation7 + $0x38] sm:$0xff]
    %v140 = vld [vmem:[#allocation7 + $0x40] sm:$0xff]
    %v141 = vperm.slane %v103, 1
    %142 = vmatpush.msra.mxu0 0.0
    %143 = vmatpush.msra.mxu0 0.0
    %144 = vmatpush.msra.mxu0 0.0
    %145 = vmatpush.msra.mxu0 0.0
    %146 = vmatpush.msra.mxu0 0.0
    %147 = vmatpush.msra.mxu0 0.0
    %148 = vmatpush.msra.mxu0 0.0
    %149 = vmatpush.msra.mxu0 0.0
    %150 = vmatpush.msra.mxu0 0.0
    %151 = vmatpush.msra.mxu0 0.0
    %152 = vmatpush.msra.mxu0 0.0
    %153 = vmatpush.msra.mxu0 0.0
    %154 = vmatpush.msra.mxu0 0.0
    %155 = vmatpush.msra.mxu0 %v140
    %156 = vmatpush.msra.mxu0 %v139
    %157 = vmatpush.msra.mxu0 %v138
    %158 = vmatmul.f32.gmra.mxu0 %v110
    %v159 = vpop.f32.mrf.mxu0
    %v160 = vadd.f32 %v141, %v159
    %161 = vmatmul.f32.gmra.mxu0 %v113
    %v162 = vpop.f32.mrf.mxu0
    %v163 = vadd.f32 %v141, %v162
    %164 = vdwg.mxu0
    %v165 = vld [vmem:[#allocation7 + $0x48] sm:$0xff]
    %v166 = vld [vmem:[#allocation7 + $0x50] sm:$0xff]
    %v167 = vld [vmem:[#allocation7 + $0x58] sm:$0xff]
    %v168 = vperm.slane %v103, 2
    %169 = vmatpush.msra.mxu0 0.0
    %170 = vmatpush.msra.mxu0 0.0
    %171 = vmatpush.msra.mxu0 0.0
    %172 = vmatpush.msra.mxu0 0.0
    %173 = vmatpush.msra.mxu0 0.0
    %174 = vmatpush.msra.mxu0 0.0
    %175 = vmatpush.msra.mxu0 0.0
    %176 = vmatpush.msra.mxu0 0.0
    %177 = vmatpush.msra.mxu0 0.0
    %178 = vmatpush.msra.mxu0 0.0
    %179 = vmatpush.msra.mxu0 0.0
    %180 = vmatpush.msra.mxu0 0.0
    %181 = vmatpush.msra.mxu0 0.0
    %182 = vmatpush.msra.mxu0 %v167
    %183 = vmatpush.msra.mxu0 %v166
    %184 = vmatpush.msra.mxu0 %v165
    %185 = vmatmul.f32.gmra.mxu0 %v110
    %v186 = vpop.f32.mrf.mxu0
    %v187 = vadd.f32 %v168, %v186
    %188 = vmatmul.f32.gmra.mxu0 %v113
    %v189 = vpop.f32.mrf.mxu0
    %v190 = vadd.f32 %v168, %v189
    %191 = vdwg.mxu0
    %vm192 = vcmask 64512
    %v194 = vsel %vm192, %v133, 0
    %v197 = vsel %vm192, %v160, 0
    %199 = vmatpush.xpose.msra.mxu0 0.0
    %200 = vmatpush.xpose.msra.mxu0 0.0
    %201 = vmatpush.xpose.msra.mxu0 0.0
    %202 = vmatpush.xpose.msra.mxu0 0.0
    %203 = vmatpush.xpose.msra.mxu0 0.0
    %204 = vmatpush.xpose.msra.mxu0 0.0
    %205 = vmatpush.xpose.msra.mxu0 0.0
    %206 = vmatpush.xpose.msra.mxu0 0.0
    %207 = vmatpush.xpose.msra.mxu0 0.0
    %208 = vmatpush.xpose.msra.mxu0 0.0
    %209 = vmatpush.xpose.msra.mxu0 0.0
    %210 = vmatpush.xpose.msra.mxu0 0.0
    %211 = vmatpush.xpose.msra.mxu0 0.0
    %212 = vmatpush.xpose.msra.mxu0 0.0
    %213 = vmatpush.xpose.msra.mxu0 0.0
    %214 = vmatpush.xpose.msra.mxu0 %v197
    %215 = vmatmul.f32.gmra.mxu0 %v194
    %v216 = vpop.f32.mrf.mxu0
    %v217 = vadd.f32 0.0, %v216
    %218 = vdwg.mxu0
    %v219 = vmul.f32 %v217, 0.35355338
    %v220 = vsel %vm192, %v219, -inf
    %221 = vmax.xlane.f32.xlu0 %v220
    %v222 = vpop.xlane.xlu0 %221
    %v223 = vsub.f32 %v219, %v222
    %v224 = vmul.f32 %v223, 1.442695
    %v225 = vpow.pop %v224
    %v226 = vsel %vm192, %v225, 0.0
    %227 = vadd.xlane.f32.xlu0 %v226
    %v228 = vpop.xlane.xlu0 %227
    %v229 = vrcp.pop %v228
    %v230 = vmul.f32 %v225, %v229
    %v232 = vsel %vm192, %v230, 0
    %234 = vmatpush.msra.mxu0 0.0
    %235 = vmatpush.msra.mxu0 0.0
    %236 = vmatpush.msra.mxu0 0.0
    %237 = vmatpush.msra.mxu0 0.0
    %238 = vmatpush.msra.mxu0 0.0
    %239 = vmatpush.msra.mxu0 0.0
    %240 = vmatpush.msra.mxu0 0.0
    %241 = vmatpush.msra.mxu0 0.0
    %242 = vmatpush.msra.mxu0 0.0
    %243 = vmatpush.msra.mxu0 0.0
    %244 = vmatpush.msra.mxu0 0.0
    %245 = vmatpush.msra.mxu0 0.0
    %246 = vmatpush.msra.mxu0 0.0
    %247 = vmatpush.msra.mxu0 0.0
    %248 = vmatpush.msra.mxu0 0.0
    %249 = vmatpush.msra.mxu0 %v187
    %250 = vmatmul.f32.gmra.mxu0 %v232
    %v251 = vpop.f32.mrf.mxu0
    %v252 = vadd.f32 0.0, %v251
    %253 = vdwg.mxu0
    %254 = vrot.lane.b32.xlu0 %v133, 120
    %v255 = vpop.permute.xlu0 %254
    %256 = vrot.lane.b32.xlu0 %v160, 120
    %v257 = vpop.permute.xlu0 %256
    %v258 = vsel %vm192, %v255, 0
    %v260 = vsel %vm192, %v257, 0
    %262 = vmatpush.xpose.msra.mxu0 0.0
    %263 = vmatpush.xpose.msra.mxu0 0.0
    %264 = vmatpush.xpose.msra.mxu0 0.0
    %265 = vmatpush.xpose.msra.mxu0 0.0
    %266 = vmatpush.xpose.msra.mxu0 0.0
    %267 = vmatpush.xpose.msra.mxu0 0.0
    %268 = vmatpush.xpose.msra.mxu0 0.0
    %269 = vmatpush.xpose.msra.mxu0 0.0
    %270 = vmatpush.xpose.msra.mxu0 0.0
    %271 = vmatpush.xpose.msra.mxu0 0.0
    %272 = vmatpush.xpose.msra.mxu0 0.0
    %273 = vmatpush.xpose.msra.mxu0 0.0
    %274 = vmatpush.xpose.msra.mxu0 0.0
    %275 = vmatpush.xpose.msra.mxu0 0.0
    %276 = vmatpush.xpose.msra.mxu0 0.0
    %277 = vmatpush.xpose.msra.mxu0 %v260
    %278 = vmatmul.f32.gmra.mxu0 %v258
    %v279 = vpop.f32.mrf.mxu0
    %v280 = vadd.f32 0.0, %v279
    %281 = vdwg.mxu0
    %v282 = vmul.f32 %v280, 0.35355338
    %v283 = vsel %vm192, %v282, -inf
    %284 = vmax.xlane.f32.xlu0 %v283
    %v285 = vpop.xlane.xlu0 %284
    %v286 = vsub.f32 %v282, %v285
    %v287 = vmul.f32 %v286, 1.442695
    %v288 = vpow.pop %v287
    %v289 = vsel %vm192, %v288, 0.0
    %290 = vadd.xlane.f32.xlu0 %v289
    %v291 = vpop.xlane.xlu0 %290
    %v292 = vrcp.pop %v291
    %v293 = vmul.f32 %v288, %v292
    %295 = vrot.lane.b32.xlu0 %v187, 120
    %v296 = vpop.permute.xlu0 %295
    %v299 = vsel %vm192, %v293, 0
    %301 = vmatpush.msra.mxu0 0.0
    %302 = vmatpush.msra.mxu0 0.0
    %303 = vmatpush.msra.mxu0 0.0
    %304 = vmatpush.msra.mxu0 0.0
    %305 = vmatpush.msra.mxu0 0.0
    %306 = vmatpush.msra.mxu0 0.0
    %307 = vmatpush.msra.mxu0 0.0
    %308 = vmatpush.msra.mxu0 0.0
    %309 = vmatpush.msra.mxu0 0.0
    %310 = vmatpush.msra.mxu0 0.0
    %311 = vmatpush.msra.mxu0 0.0
    %312 = vmatpush.msra.mxu0 0.0
    %313 = vmatpush.msra.mxu0 0.0
    %314 = vmatpush.msra.mxu0 0.0
    %315 = vmatpush.msra.mxu0 0.0
    %316 = vmatpush.msra.mxu0 %v296
    %317 = vmatmul.f32.gmra.mxu0 %v299
    %v318 = vpop.f32.mrf.mxu0
    %v319 = vadd.f32 0.0, %v318
    %320 = vdwg.mxu0
    %321 = vrot.lane.b32.xlu0 %v133, 112
    %v322 = vpop.permute.xlu0 %321
    %323 = vrot.lane.b32.xlu0 %v160, 112
    %v324 = vpop.permute.xlu0 %323
    %v325 = vsel %vm192, %v322, 0
    %v327 = vsel %vm192, %v324, 0
    %329 = vmatpush.xpose.msra.mxu0 0.0
    %330 = vmatpush.xpose.msra.mxu0 0.0
    %331 = vmatpush.xpose.msra.mxu0 0.0
    %332 = vmatpush.xpose.msra.mxu0 0.0
    %333 = vmatpush.xpose.msra.mxu0 0.0
    %334 = vmatpush.xpose.msra.mxu0 0.0
    %335 = vmatpush.xpose.msra.mxu0 0.0
    %336 = vmatpush.xpose.msra.mxu0 0.0
    %337 = vmatpush.xpose.msra.mxu0 0.0
    %338 = vmatpush.xpose.msra.mxu0 0.0
    %339 = vmatpush.xpose.msra.mxu0 0.0
    %340 = vmatpush.xpose.msra.mxu0 0.0
    %341 = vmatpush.xpose.msra.mxu0 0.0
    %342 = vmatpush.xpose.msra.mxu0 0.0
    %343 = vmatpush.xpose.msra.mxu0 0.0
    %344 = vmatpush.xpose.msra.mxu0 %v327
    %345 = vmatmul.f32.gmra.mxu0 %v325
    %v346 = vpop.f32.mrf.mxu0
    %v347 = vadd.f32 0.0, %v346
    %348 = vdwg.mxu0
    %v349 = vmul.f32 %v347, 0.35355338
    %v350 = vsel %vm192, %v349, -inf
    %351 = vmax.xlane.f32.xlu0 %v350
    %v352 = vpop.xlane.xlu0 %351
    %v353 = vsub.f32 %v349, %v352
    %v354 = vmul.f32 %v353, 1.442695
    %v355 = vpow.pop %v354
    %v356 = vsel %vm192, %v355, 0.0
    %357 = vadd.xlane.f32.xlu0 %v356
    %v358 = vpop.xlane.xlu0 %357
    %v359 = vrcp.pop %v358
    %v360 = vmul.f32 %v355, %v359
    %361 = vrot.lane.b32.xlu0 %v187, 112
    %v362 = vpop.permute.xlu0 %361
    %v365 = vsel %vm192, %v360, 0
    %367 = vmatpush.msra.mxu0 0.0
    %368 = vmatpush.msra.mxu0 0.0
    %369 = vmatpush.msra.mxu0 0.0
    %370 = vmatpush.msra.mxu0 0.0
    %371 = vmatpush.msra.mxu0 0.0
    %372 = vmatpush.msra.mxu0 0.0
    %373 = vmatpush.msra.mxu0 0.0
    %374 = vmatpush.msra.mxu0 0.0
    %375 = vmatpush.msra.mxu0 0.0
    %376 = vmatpush.msra.mxu0 0.0
    %377 = vmatpush.msra.mxu0 0.0
    %378 = vmatpush.msra.mxu0 0.0
    %379 = vmatpush.msra.mxu0 0.0
    %380 = vmatpush.msra.mxu0 0.0
    %381 = vmatpush.msra.mxu0 0.0
    %382 = vmatpush.msra.mxu0 %v362
    %383 = vmatmul.f32.gmra.mxu0 %v365
    %v384 = vpop.f32.mrf.mxu0
    %v385 = vadd.f32 0.0, %v384
    %386 = vdwg.mxu0
    %388 = vrot.lane.b32.xlu0 %v319, 8
    %v389 = vpop.permute.xlu0 %388
    %392 = vrot.lane.b32.xlu0 %v385, 16
    %v393 = vpop.permute.xlu0 %392
    %v395 = vsel %vm192, %v252, %v389
    %v396 = vsel %vm79, %v395, %v393
    %v398 = vsel %vm192, %v136, 0
    %v401 = vsel %vm192, %v163, 0
    %403 = vmatpush.xpose.msra.mxu0 0.0
    %404 = vmatpush.xpose.msra.mxu0 0.0
    %405 = vmatpush.xpose.msra.mxu0 0.0
    %406 = vmatpush.xpose.msra.mxu0 0.0
    %407 = vmatpush.xpose.msra.mxu0 0.0
    %408 = vmatpush.xpose.msra.mxu0 0.0
    %409 = vmatpush.xpose.msra.mxu0 0.0
    %410 = vmatpush.xpose.msra.mxu0 0.0
    %411 = vmatpush.xpose.msra.mxu0 0.0
    %412 = vmatpush.xpose.msra.mxu0 0.0
    %413 = vmatpush.xpose.msra.mxu0 0.0
    %414 = vmatpush.xpose.msra.mxu0 0.0
    %415 = vmatpush.xpose.msra.mxu0 0.0
    %416 = vmatpush.xpose.msra.mxu0 0.0
    %417 = vmatpush.xpose.msra.mxu0 0.0
    %418 = vmatpush.xpose.msra.mxu0 %v401
    %419 = vmatmul.f32.gmra.mxu0 %v398
    %v420 = vpop.f32.mrf.mxu0
    %v421 = vadd.f32 0.0, %v420
    %422 = vdwg.mxu0
    %v423 = vmul.f32 %v421, 0.35355338
    %v424 = vsel %vm192, %v423, -inf
    %425 = vmax.xlane.f32.xlu0 %v424
    %v426 = vpop.xlane.xlu0 %425
    %v427 = vsub.f32 %v423, %v426
    %v428 = vmul.f32 %v427, 1.442695
    %v429 = vpow.pop %v428
    %v430 = vsel %vm192, %v429, 0.0
    %431 = vadd.xlane.f32.xlu0 %v430
    %v432 = vpop.xlane.xlu0 %431
    %v433 = vrcp.pop %v432
    %v434 = vmul.f32 %v429, %v433
    %v436 = vsel %vm192, %v434, 0
    %438 = vmatpush.msra.mxu0 0.0
    %439 = vmatpush.msra.mxu0 0.0
    %440 = vmatpush.msra.mxu0 0.0
    %441 = vmatpush.msra.mxu0 0.0
    %442 = vmatpush.msra.mxu0 0.0
    %443 = vmatpush.msra.mxu0 0.0
    %444 = vmatpush.msra.mxu0 0.0
    %445 = vmatpush.msra.mxu0 0.0
    %446 = vmatpush.msra.mxu0 0.0
    %447 = vmatpush.msra.mxu0 0.0
    %448 = vmatpush.msra.mxu0 0.0
    %449 = vmatpush.msra.mxu0 0.0
    %450 = vmatpush.msra.mxu0 0.0
    %451 = vmatpush.msra.mxu0 0.0
    %452 = vmatpush.msra.mxu0 0.0
    %453 = vmatpush.msra.mxu0 %v190
    %454 = vmatmul.f32.gmra.mxu0 %v436
    %v455 = vpop.f32.mrf.mxu0
    %v456 = vadd.f32 0.0, %v455
    %457 = vdwg.mxu0
    %458 = vrot.lane.b32.xlu0 %v136, 120
    %v459 = vpop.permute.xlu0 %458
    %460 = vrot.lane.b32.xlu0 %v163, 120
    %v461 = vpop.permute.xlu0 %460
    %v462 = vsel %vm192, %v459, 0
    %v464 = vsel %vm192, %v461, 0
    %466 = vmatpush.xpose.msra.mxu0 0.0
    %467 = vmatpush.xpose.msra.mxu0 0.0
    %468 = vmatpush.xpose.msra.mxu0 0.0
    %469 = vmatpush.xpose.msra.mxu0 0.0
    %470 = vmatpush.xpose.msra.mxu0 0.0
    %471 = vmatpush.xpose.msra.mxu0 0.0
    %472 = vmatpush.xpose.msra.mxu0 0.0
    %473 = vmatpush.xpose.msra.mxu0 0.0
    %474 = vmatpush.xpose.msra.mxu0 0.0
    %475 = vmatpush.xpose.msra.mxu0 0.0
    %476 = vmatpush.xpose.msra.mxu0 0.0
    %477 = vmatpush.xpose.msra.mxu0 0.0
    %478 = vmatpush.xpose.msra.mxu0 0.0
    %479 = vmatpush.xpose.msra.mxu0 0.0
    %480 = vmatpush.xpose.msra.mxu0 0.0
    %481 = vmatpush.xpose.msra.mxu0 %v464
    %482 = vmatmul.f32.gmra.mxu0 %v462
    %v483 = vpop.f32.mrf.mxu0
    %v484 = vadd.f32 0.0, %v483
    %485 = vdwg.mxu0
    %v486 = vmul.f32 %v484, 0.35355338
    %v487 = vsel %vm192, %v486, -inf
    %488 = vmax.xlane.f32.xlu0 %v487
    %v489 = vpop.xlane.xlu0 %488
    %v490 = vsub.f32 %v486, %v489
    %v491 = vmul.f32 %v490, 1.442695
    %v492 = vpow.pop %v491
    %v493 = vsel %vm192, %v492, 0.0
    %494 = vadd.xlane.f32.xlu0 %v493
    %v495 = vpop.xlane.xlu0 %494
    %v496 = vrcp.pop %v495
    %v497 = vmul.f32 %v492, %v496
    %499 = vrot.lane.b32.xlu0 %v190, 120
    %v500 = vpop.permute.xlu0 %499
    %v503 = vsel %vm192, %v497, 0
    %505 = vmatpush.msra.mxu0 0.0
    %506 = vmatpush.msra.mxu0 0.0
    %507 = vmatpush.msra.mxu0 0.0
    %508 = vmatpush.msra.mxu0 0.0
    %509 = vmatpush.msra.mxu0 0.0
    %510 = vmatpush.msra.mxu0 0.0
    %511 = vmatpush.msra.mxu0 0.0
    %512 = vmatpush.msra.mxu0 0.0
    %513 = vmatpush.msra.mxu0 0.0
    %514 = vmatpush.msra.mxu0 0.0
    %515 = vmatpush.msra.mxu0 0.0
    %516 = vmatpush.msra.mxu0 0.0
    %517 = vmatpush.msra.mxu0 0.0
    %518 = vmatpush.msra.mxu0 0.0
    %519 = vmatpush.msra.mxu0 0.0
    %520 = vmatpush.msra.mxu0 %v500
    %521 = vmatmul.f32.gmra.mxu0 %v503
    %v522 = vpop.f32.mrf.mxu0
    %v523 = vadd.f32 0.0, %v522
    %524 = vdwg.mxu0
    %525 = vrot.lane.b32.xlu0 %v136, 112
    %v526 = vpop.permute.xlu0 %525
    %527 = vrot.lane.b32.xlu0 %v163, 112
    %v528 = vpop.permute.xlu0 %527
    %v529 = vsel %vm192, %v526, 0
    %v531 = vsel %vm192, %v528, 0
    %533 = vmatpush.xpose.msra.mxu0 0.0
    %534 = vmatpush.xpose.msra.mxu0 0.0
    %535 = vmatpush.xpose.msra.mxu0 0.0
    %536 = vmatpush.xpose.msra.mxu0 0.0
    %537 = vmatpush.xpose.msra.mxu0 0.0
    %538 = vmatpush.xpose.msra.mxu0 0.0
    %539 = vmatpush.xpose.msra.mxu0 0.0
    %540 = vmatpush.xpose.msra.mxu0 0.0
    %541 = vmatpush.xpose.msra.mxu0 0.0
    %542 = vmatpush.xpose.msra.mxu0 0.0
    %543 = vmatpush.xpose.msra.mxu0 0.0
    %544 = vmatpush.xpose.msra.mxu0 0.0
    %545 = vmatpush.xpose.msra.mxu0 0.0
    %546 = vmatpush.xpose.msra.mxu0 0.0
    %547 = vmatpush.xpose.msra.mxu0 0.0
    %548 = vmatpush.xpose.msra.mxu0 %v531
    %549 = vmatmul.f32.gmra.mxu0 %v529
    %v550 = vpop.f32.mrf.mxu0
    %v551 = vadd.f32 0.0, %v550
    %552 = vdwg.mxu0
    %v553 = vmul.f32 %v551, 0.35355338
    %v554 = vsel %vm192, %v553, -inf
    %555 = vmax.xlane.f32.xlu0 %v554
    %v556 = vpop.xlane.xlu0 %555
    %v557 = vsub.f32 %v553, %v556
    %v558 = vmul.f32 %v557, 1.442695
    %v559 = vpow.pop %v558
    %v560 = vsel %vm192, %v559, 0.0
    %561 = vadd.xlane.f32.xlu0 %v560
    %v562 = vpop.xlane.xlu0 %561
    %v563 = vrcp.pop %v562
    %v564 = vmul.f32 %v559, %v563
    %565 = vrot.lane.b32.xlu0 %v190, 112
    %v566 = vpop.permute.xlu0 %565
    %v569 = vsel %vm192, %v564, 0
    %571 = vmatpush.msra.mxu0 0.0
    %572 = vmatpush.msra.mxu0 0.0
    %573 = vmatpush.msra.mxu0 0.0
    %574 = vmatpush.msra.mxu0 0.0
    %575 = vmatpush.msra.mxu0 0.0
    %576 = vmatpush.msra.mxu0 0.0
    %577 = vmatpush.msra.mxu0 0.0
    %578 = vmatpush.msra.mxu0 0.0
    %579 = vmatpush.msra.mxu0 0.0
    %580 = vmatpush.msra.mxu0 0.0
    %581 = vmatpush.msra.mxu0 0.0
    %582 = vmatpush.msra.mxu0 0.0
    %583 = vmatpush.msra.mxu0 0.0
    %584 = vmatpush.msra.mxu0 0.0
    %585 = vmatpush.msra.mxu0 0.0
    %586 = vmatpush.msra.mxu0 %v566
    %587 = vmatmul.f32.gmra.mxu0 %v569
    %v588 = vpop.f32.mrf.mxu0
    %v589 = vadd.f32 0.0, %v588
    %590 = vdwg.mxu0
    %592 = vrot.lane.b32.xlu0 %v523, 8
    %v593 = vpop.permute.xlu0 %592
    %596 = vrot.lane.b32.xlu0 %v589, 16
    %v597 = vpop.permute.xlu0 %596
    %v599 = vsel %vm192, %v456, %v593
    %v600 = vsel %vm79, %v599, %v597
    %v601 = vld [vmem:[#allocation7 + $0x60] sm:$0xff]
    %v602 = vld [vmem:[#allocation7 + $0x68] sm:$0xff]
    %v603 = vld [vmem:[#allocation7 + $0x70] sm:$0xff]
    %v604 = vld [vmem:[#allocation7 + $0x80] sm:$0x1]
    %v605 = vperm.slane %v604, 0
    %v607 = vsel %vm108, %v396, 0
    %v610 = vsel %vm108, %v600, 0
    %612 = vmatpush.msra.mxu0 0.0
    %613 = vmatpush.msra.mxu0 0.0
    %614 = vmatpush.msra.mxu0 0.0
    %615 = vmatpush.msra.mxu0 0.0
    %616 = vmatpush.msra.mxu0 0.0
    %617 = vmatpush.msra.mxu0 0.0
    %618 = vmatpush.msra.mxu0 0.0
    %619 = vmatpush.msra.mxu0 0.0
    %620 = vmatpush.msra.mxu0 0.0
    %621 = vmatpush.msra.mxu0 0.0
    %622 = vmatpush.msra.mxu0 0.0
    %623 = vmatpush.msra.mxu0 0.0
    %624 = vmatpush.msra.mxu0 0.0
    %625 = vmatpush.msra.mxu0 %v603
    %626 = vmatpush.msra.mxu0 %v602
    %627 = vmatpush.msra.mxu0 %v601
    %628 = vmatmul.f32.gmra.mxu0 %v607
    %v629 = vpop.f32.mrf.mxu0
    %v630 = vadd.f32 %v605, %v629
    %631 = vmatmul.f32.gmra.mxu0 %v610
    %v632 = vpop.f32.mrf.mxu0
    %v633 = vadd.f32 %v605, %v632
    %634 = vdwg.mxu0
    %v635 = vadd.f32 %v64, %v630
    %v636 = vadd.f32 %v66, %v633
    %v637 = vsel %vm108, %v635, 0.0
    %638 = vadd.xlane.f32.xlu0 %v637
    %v639 = vpop.xlane.xlu0 %638
    %v640 = vsel %vm108, %v636, 0.0
    %641 = vadd.xlane.f32.xlu0 %v640
    %v642 = vpop.xlane.xlu0 %641
    %v643 = vrcp.pop 24.0
    %v644 = vmul.f32 24.0, %v643
    %v645 = vsub.f32 1.0, %v644
    %v646 = vmul.f32 %v643, %v645
    %v647 = vadd.f32 %v643, %v646
    %vm648 = vweird.f32 %v643
    %v649 = vsel %vm648, %v643, %v647
    %v650 = vmul.f32 %v639, %v649
    %v651 = vmul.f32 %v642, %v649
    %v652 = vsub.f32 %v635, %v650
    %v653 = vsub.f32 %v636, %v651
    %v654 = vmul.f32 %v652, %v652
    %v655 = vmul.f32 %v653, %v653
    %v656 = vsel %vm108, %v654, 0.0
    %657 = vadd.xlane.f32.xlu0 %v656
    %v658 = vpop.xlane.xlu0 %657
    %v659 = vsel %vm108, %v655, 0.0
    %660 = vadd.xlane.f32.xlu0 %v659
    %v661 = vpop.xlane.xlu0 %660
    %v662 = vmul.f32 %v658, %v649
    %v663 = vmul.f32 %v661, %v649
    %v664 = vadd.f32 %v662, 1e-05
    %v665 = vadd.f32 %v663, 1e-05
    %v666 = vrsqrt.pop %v664
    %v667 = vmul.f32 %v666, %v664
    %v668 = vmul.f32 %v667, %v666
    %v669 = vmul.f32 0.5, %v668
    %v670 = vsub.f32 1.5, %v669
    %v671 = vmul.f32 %v666, %v670
    %vm672 = vweird.f32 %v664
    %vm673 = vweird.f32 %v666
    %vm674 = vmor %vm672, %vm673
    %v675 = vsel %vm674, %v666, %v671
    %v676 = vrsqrt.pop %v665
    %v677 = vmul.f32 %v676, %v665
    %v678 = vmul.f32 %v677, %v676
    %v679 = vmul.f32 0.5, %v678
    %v680 = vsub.f32 1.5, %v679
    %v681 = vmul.f32 %v676, %v680
    %vm682 = vweird.f32 %v665
    %vm683 = vweird.f32 %v676
    %vm684 = vmor %vm682, %vm683
    %v685 = vsel %vm684, %v676, %v681
    %v686 = vmul.f32 %v652, %v675
    %v687 = vmul.f32 %v653, %v685
    %v688 = vperm.slane %v62, 0
    %v689 = vmul.f32 %v686, %v688
    %v690 = vmul.f32 %v687, %v688
    %v691 = vperm.slane %v63, 0
    %v692 = vadd.f32 %v689, %v691
    %v693 = vadd.f32 %v690, %v691
    %v694 = vld [vmem:[#allocation7 + $0x168] sm:$0xff]
    %v695 = vld [vmem:[#allocation7 + $0x170] sm:$0xff]
    %v696 = vld [vmem:[#allocation7 + $0x178] sm:$0xff]
    %v697 = vld [vmem:[#allocation7 + $0x180] sm:$0x1]
    %v698 = vperm.slane %v697, 0
    %v700 = vsel %vm108, %v692, 0
    %v703 = vsel %vm108, %v693, 0
    %705 = vmatpush.msra.mxu0 0.0
    %706 = vmatpush.msra.mxu0 0.0
    %707 = vmatpush.msra.mxu0 0.0
    %708 = vmatpush.msra.mxu0 0.0
    %709 = vmatpush.msra.mxu0 0.0
    %710 = vmatpush.msra.mxu0 0.0
    %711 = vmatpush.msra.mxu0 0.0
    %712 = vmatpush.msra.mxu0 0.0
    %713 = vmatpush.msra.mxu0 0.0
    %714 = vmatpush.msra.mxu0 0.0
    %715 = vmatpush.msra.mxu0 0.0
    %716 = vmatpush.msra.mxu0 0.0
    %717 = vmatpush.msra.mxu0 0.0
    %718 = vmatpush.msra.mxu0 %v696
    %719 = vmatpush.msra.mxu0 %v695
    %720 = vmatpush.msra.mxu0 %v694
    %721 = vmatmul.f32.gmra.mxu0 %v700
    %v722 = vpop.f32.mrf.mxu0
    %v723 = vadd.f32 %v698, %v722
    %724 = vmatmul.f32.gmra.mxu0 %v703
    %v725 = vpop.f32.mrf.mxu0
    %v726 = vadd.f32 %v698, %v725
    %727 = vdwg.mxu0
    %v728 = vmax.f32 %v723, 0.0
    %v729 = vmax.f32 %v726, 0.0
    %v730 = vld [vmem:[#allocation7 + $0x188] sm:$0xff]
    %v731 = vld [vmem:[#allocation7 + $0x190] sm:$0xff]
    %v732 = vld [vmem:[#allocation7 + $0x198] sm:$0xff]
    %v733 = vld [vmem:[#allocation7 + $0x1a0] sm:$0xff]
    %v734 = vld [vmem:[#allocation7 + $0x1a8] sm:$0xff]
    %v735 = vld [vmem:[#allocation7 + $0x1b0] sm:$0xff]
    %v736 = vld [vmem:[#allocation7 + $0x1b8] sm:$0xff]
    %v737 = vld [vmem:[#allocation7 + $0x1c0] sm:$0xff]
    %v738 = vld [vmem:[#allocation7 + $0x1c8] sm:$0xff]
    %v739 = vld [vmem:[#allocation7 + $0x1d0] sm:$0xff]
    %v740 = vld [vmem:[#allocation7 + $0x1d8] sm:$0xff]
    %v741 = vld [vmem:[#allocation7 + $0x1e0] sm:$0xff]
    %v742 = vld [vmem:[#allocation7 + $0x1e8] sm:$0xff]
    %v743 = vld [vmem:[#allocation7 + $0x1f0] sm:$0xff]
    %v744 = vld [vmem:[#allocation7 + $0x1f8] sm:$0xff]
    %v745 = vld [vmem:[#allocation7 + $0x200] sm:$0xff]
    %v746 = vld [vmem:[#allocation7 + $0x208] sm:$0x1]
    %v747 = vperm.slane %v746, 0
    %748 = vmatpush.msra.mxu0 %v745
    %749 = vmatpush.msra.mxu0 %v744
    %750 = vmatpush.msra.mxu0 %v743
    %751 = vmatpush.msra.mxu0 %v742
    %752 = vmatpush.msra.mxu0 %v741
    %753 = vmatpush.msra.mxu0 %v740
    %754 = vmatpush.msra.mxu0 %v739
    %755 = vmatpush.msra.mxu0 %v738
    %756 = vmatpush.msra.mxu0 %v737
    %757 = vmatpush.msra.mxu0 %v736
    %758 = vmatpush.msra.mxu0 %v735
    %759 = vmatpush.msra.mxu0 %v734
    %760 = vmatpush.msra.mxu0 %v733
    %761 = vmatpush.msra.mxu0 %v732
    %762 = vmatpush.msra.mxu0 %v731
    %763 = vmatpush.msra.mxu0 %v730
    %764 = vmatmul.f32.gmra.mxu0 %v728
    %v765 = vpop.f32.mrf.mxu0
    %v766 = vadd.f32 %v747, %v765
    %767 = vmatmul.f32.gmra.mxu0 %v729
    %v768 = vpop.f32.mrf.mxu0
    %v769 = vadd.f32 %v747, %v768
    %770 = vdwg.mxu0
    %v771 = vadd.f32 %v692, %v766
    %v772 = vadd.f32 %v693, %v769
    %v773 = vsel %vm108, %v771, 0.0
    %774 = vadd.xlane.f32.xlu0 %v773
    %v775 = vpop.xlane.xlu0 %774
    %v776 = vsel %vm108, %v772, 0.0
    %777 = vadd.xlane.f32.xlu0 %v776
    %v778 = vpop.xlane.xlu0 %777
    %v779 = vmul.f32 %v775, %v649
    %v780 = vmul.f32 %v778, %v649
    %v781 = vsub.f32 %v771, %v779
    %v782 = vsub.f32 %v772, %v780
    %v783 = vmul.f32 %v781, %v781
    %v784 = vmul.f32 %v782, %v782
    %v785 = vsel %vm108, %v783, 0.0
    %786 = vadd.xlane.f32.xlu0 %v785
    %v787 = vpop.xlane.xlu0 %786
    %v788 = vsel %vm108, %v784, 0.0
    %789 = vadd.xlane.f32.xlu0 %v788
    %v790 = vpop.xlane.xlu0 %789
    %v791 = vmul.f32 %v787, %v649
    %v792 = vmul.f32 %v790, %v649
    %v793 = vadd.f32 %v791, 1e-05
    %v794 = vadd.f32 %v792, 1e-05
    %v795 = vrsqrt.pop %v793
    %v796 = vmul.f32 %v795, %v793
    %v797 = vmul.f32 %v796, %v795
    %v798 = vmul.f32 0.5, %v797
    %v799 = vsub.f32 1.5, %v798
    %v800 = vmul.f32 %v795, %v799
    %vm801 = vweird.f32 %v793
    %vm802 = vweird.f32 %v795
    %vm803 = vmor %vm801, %vm802
    %v804 = vsel %vm803, %v795, %v800
    %v805 = vrsqrt.pop %v794
    %v806 = vmul.f32 %v805, %v794
    %v807 = vmul.f32 %v806, %v805
    %v808 = vmul.f32 0.5, %v807
    %v809 = vsub.f32 1.5, %v808
    %v810 = vmul.f32 %v805, %v809
    %vm811 = vweird.f32 %v794
    %vm812 = vweird.f32 %v805
    %vm813 = vmor %vm811, %vm812
    %v814 = vsel %vm813, %v805, %v810
    %v815 = vmul.f32 %v781, %v804
    %v816 = vmul.f32 %v782, %v814
    %v817 = vperm.slane %v62, 1
    %v818 = vmul.f32 %v815, %v817
    %v819 = vmul.f32 %v816, %v817
    %v820 = vperm.slane %v63, 1
    %v821 = vadd.f32 %v818, %v820
    %v822 = vadd.f32 %v819, %v820
    %v823 = vsel %vm108, %v821, 0.0
    %824 = vadd.xlane.f32.xlu0 %v823
    %v825 = vpop.xlane.xlu0 %824
    %v826 = vsel %vm108, %v822, 0.0
    %827 = vadd.xlane.f32.xlu0 %v826
    %v828 = vpop.xlane.xlu0 %827
    %v829 = vmul.f32 %v825, %v649
    %v830 = vmul.f32 %v828, %v649
    %v831 = vsub.f32 %v821, %v829
    %v832 = vsub.f32 %v822, %v830
    %v833 = vmul.f32 %v831, %v831
    %v834 = vmul.f32 %v832, %v832
    %v835 = vsel %vm108, %v833, 0.0
    %836 = vadd.xlane.f32.xlu0 %v835
    %v837 = vpop.xlane.xlu0 %836
    %v838 = vsel %vm108, %v834, 0.0
    %839 = vadd.xlane.f32.xlu0 %v838
    %v840 = vpop.xlane.xlu0 %839
    %v841 = vmul.f32 %v837, %v649
    %v842 = vmul.f32 %v840, %v649
    %v843 = vadd.f32 %v841, 1e-05
    %v844 = vadd.f32 %v842, 1e-05
    %v845 = vrsqrt.pop %v843
    %v846 = vmul.f32 %v845, %v843
    %v847 = vmul.f32 %v846, %v845
    %v848 = vmul.f32 0.5, %v847
    %v849 = vsub.f32 1.5, %v848
    %v850 = vmul.f32 %v845, %v849
    %vm851 = vweird.f32 %v843
    %vm852 = vweird.f32 %v845
    %vm853 = vmor %vm851, %vm852
    %v854 = vsel %vm853, %v845, %v850
    %v855 = vrsqrt.pop %v844
    %v856 = vmul.f32 %v855, %v844
    %v857 = vmul.f32 %v856, %v855
    %v858 = vmul.f32 0.5, %v857
    %v859 = vsub.f32 1.5, %v858
    %v860 = vmul.f32 %v855, %v859
    %vm861 = vweird.f32 %v844
    %vm862 = vweird.f32 %v855
    %vm863 = vmor %vm861, %vm862
    %v864 = vsel %vm863, %v855, %v860
    %v865 = vmul.f32 %v831, %v854
    %v866 = vmul.f32 %v832, %v864
    %v867 = vperm.slane %v62, 2
    %v868 = vmul.f32 %v865, %v867
    %v869 = vmul.f32 %v866, %v867
    %v870 = vperm.slane %v63, 2
    %v871 = vadd.f32 %v868, %v870
    %v872 = vadd.f32 %v869, %v870
    %v873 = vld [vmem:[#allocation7 + $0xb8] sm:$0xff]
    %v874 = vld [vmem:[#allocation7 + $0xc0] sm:$0xff]
    %v875 = vld [vmem:[#allocation7 + $0xc8] sm:$0xff]
    %v876 = vld [vmem:[#allocation7 + $0xe8] sm:$0x7]
    %v877 = vperm.slane %v876, 2
    %v879 = vsel %vm108, %v101, 0
    %881 = vmatpush.msra.mxu0 0.0
    %882 = vmatpush.msra.mxu0 0.0
    %883 = vmatpush.msra.mxu0 0.0
    %884 = vmatpush.msra.mxu0 0.0
    %885 = vmatpush.msra.mxu0 0.0
    %886 = vmatpush.msra.mxu0 0.0
    %887 = vmatpush.msra.mxu0 0.0
    %888 = vmatpush.msra.mxu0 0.0
    %889 = vmatpush.msra.mxu0 0.0
    %890 = vmatpush.msra.mxu0 0.0
    %891 = vmatpush.msra.mxu0 0.0
    %892 = vmatpush.msra.mxu0 0.0
    %893 = vmatpush.msra.mxu0 0.0
    %894 = vmatpush.msra.mxu0 %v875
    %895 = vmatpush.msra.mxu0 %v874
    %896 = vmatpush.msra.mxu0 %v873
    %897 = vmatmul.f32.gmra.mxu0 %v879
    %v898 = vpop.f32.mrf.mxu0
    %v899 = vadd.f32 %v877, %v898
    %900 = vdwg.mxu0
    %v901 = vld [vmem:[#allocation7 + $0xd0] sm:$0xff]
    %v902 = vld [vmem:[#allocation7 + $0xd8] sm:$0xff]
    %v903 = vld [vmem:[#allocation7 + $0xe0] sm:$0xff]
    %v904 = vld [vmem:[#allocation7 + $0xf0] sm:$0x1]
    %v905 = vperm.slane %v904, 0
    %v907 = vsel %vm108, %v899, 0
    %909 = vmatpush.msra.mxu0 0.0
    %910 = vmatpush.msra.mxu0 0.0
    %911 = vmatpush.msra.mxu0 0.0
    %912 = vmatpush.msra.mxu0 0.0
    %913 = vmatpush.msra.mxu0 0.0
    %914 = vmatpush.msra.mxu0 0.0
    %915 = vmatpush.msra.mxu0 0.0
    %916 = vmatpush.msra.mxu0 0.0
    %917 = vmatpush.msra.mxu0 0.0
    %918 = vmatpush.msra.mxu0 0.0
    %919 = vmatpush.msra.mxu0 0.0
    %920 = vmatpush.msra.mxu0 0.0
    %921 = vmatpush.msra.mxu0 0.0
    %922 = vmatpush.msra.mxu0 %v903
    %923 = vmatpush.msra.mxu0 %v902
    %924 = vmatpush.msra.mxu0 %v901
    %925 = vmatmul.f32.gmra.mxu0 %v907
    %v926 = vpop.f32.mrf.mxu0
    %v927 = vadd.f32 %v905, %v926
    %928 = vdwg.mxu0
    %v929 = vadd.f32 %v101, %v927
    %vm930 = vcmask 189440
    %v931 = vsel %vm930, %v929, 0.0
    %932 = vadd.xlane.f32.xlu0 %v931
    %v933 = vpop.xlane.xlu0 %932
    %v934 = vmul.f32 %v933, %v649
    %v935 = vsub.f32 %v929, %v934
    %v936 = vmul.f32 %v935, %v935
    %v937 = vsel %vm930, %v936, 0.0
    %938 = vadd.xlane.f32.xlu0 %v937
    %v939 = vpop.xlane.xlu0 %938
    %v940 = vmul.f32 %v939, %v649
    %v941 = vadd.f32 %v940, 1e-05
    %v942 = vrsqrt.pop %v941
    %v943 = vmul.f32 %v942, %v941
    %v944 = vmul.f32 %v943, %v942
    %v945 = vmul.f32 0.5, %v944
    %v946 = vsub.f32 1.5, %v945
    %v947 = vmul.f32 %v942, %v946
    %vm948 = vweird.f32 %v941
    %vm949 = vweird.f32 %v942
    %vm950 = vmor %vm948, %vm949
    %v951 = vsel %vm950, %v942, %v947
    %v952 = vmul.f32 %v935, %v951
    %v953 = vperm.slane %v62, 3
    %v954 = vmul.f32 %v952, %v953
    %v955 = vperm.slane %v63, 3
    %v956 = vadd.f32 %v954, %v955
    %v957 = vld [vmem:[#allocation7 + $0x158] sm:$0x7]
    %v958 = vld [vmem:[#allocation7 + $0xf8] sm:$0xff]
    %v959 = vld [vmem:[#allocation7 + $0x100] sm:$0xff]
    %v960 = vld [vmem:[#allocation7 + $0x108] sm:$0xff]
    %v961 = vperm.slane %v957, 0
    %v963 = vsel %vm108, %v956, 0
    %965 = vmatpush.msra.mxu0 0.0
    %966 = vmatpush.msra.mxu0 0.0
    %967 = vmatpush.msra.mxu0 0.0
    %968 = vmatpush.msra.mxu0 0.0
    %969 = vmatpush.msra.mxu0 0.0
    %970 = vmatpush.msra.mxu0 0.0
    %971 = vmatpush.msra.mxu0 0.0
    %972 = vmatpush.msra.mxu0 0.0
    %973 = vmatpush.msra.mxu0 0.0
    %974 = vmatpush.msra.mxu0 0.0
    %975 = vmatpush.msra.mxu0 0.0
    %976 = vmatpush.msra.mxu0 0.0
    %977 = vmatpush.msra.mxu0 0.0
    %978 = vmatpush.msra.mxu0 %v960
    %979 = vmatpush.msra.mxu0 %v959
    %980 = vmatpush.msra.mxu0 %v958
    %981 = vmatmul.f32.gmra.mxu0 %v963
    %v982 = vpop.f32.mrf.mxu0
    %v983 = vadd.f32 %v961, %v982
    %984 = vdwg.mxu0
    %v985 = vld [vmem:[#allocation7 + $0x110] sm:$0xff]
    %v986 = vld [vmem:[#allocation7 + $0x118] sm:$0xff]
    %v987 = vld [vmem:[#allocation7 + $0x120] sm:$0xff]
    %v988 = vperm.slane %v957, 1
    %v990 = vsel %vm108, %v871, 0
    %v993 = vsel %vm108, %v872, 0
    %995 = vmatpush.msra.mxu0 0.0
    %996 = vmatpush.msra.mxu0 0.0
    %997 = vmatpush.msra.mxu0 0.0
    %998 = vmatpush.msra.mxu0 0.0
    %999 = vmatpush.msra.mxu0 0.0
    %1000 = vmatpush.msra.mxu0 0.0
    %1001 = vmatpush.msra.mxu0 0.0
    %1002 = vmatpush.msra.mxu0 0.0
    %1003 = vmatpush.msra.mxu0 0.0
    %1004 = vmatpush.msra.mxu0 0.0
    %1005 = vmatpush.msra.mxu0 0.0
    %1006 = vmatpush.msra.mxu0 0.0
    %1007 = vmatpush.msra.mxu0 0.0
    %1008 = vmatpush.msra.mxu0 %v987
    %1009 = vmatpush.msra.mxu0 %v986
    %1010 = vmatpush.msra.mxu0 %v985
    %1011 = vmatmul.f32.gmra.mxu0 %v990
    %v1012 = vpop.f32.mrf.mxu0
    %v1013 = vadd.f32 %v988, %v1012
    %1014 = vmatmul.f32.gmra.mxu0 %v993
    %v1015 = vpop.f32.mrf.mxu0
    %v1016 = vadd.f32 %v988, %v1015
    %1017 = vdwg.mxu0
    %v1018 = vld [vmem:[#allocation7 + $0x128] sm:$0xff]
    %v1019 = vld [vmem:[#allocation7 + $0x130] sm:$0xff]
    %v1020 = vld [vmem:[#allocation7 + $0x138] sm:$0xff]
    %v1021 = vperm.slane %v957, 2
    %1022 = vmatpush.msra.mxu0 0.0
    %1023 = vmatpush.msra.mxu0 0.0
    %1024 = vmatpush.msra.mxu0 0.0
    %1025 = vmatpush.msra.mxu0 0.0
    %1026 = vmatpush.msra.mxu0 0.0
    %1027 = vmatpush.msra.mxu0 0.0
    %1028 = vmatpush.msra.mxu0 0.0
    %1029 = vmatpush.msra.mxu0 0.0
    %1030 = vmatpush.msra.mxu0 0.0
    %1031 = vmatpush.msra.mxu0 0.0
    %1032 = vmatpush.msra.mxu0 0.0
    %1033 = vmatpush.msra.mxu0 0.0
    %1034 = vmatpush.msra.mxu0 0.0
    %1035 = vmatpush.msra.mxu0 %v1020
    %1036 = vmatpush.msra.mxu0 %v1019
    %1037 = vmatpush.msra.mxu0 %v1018
    %1038 = vmatmul.f32.gmra.mxu0 %v990
    %v1039 = vpop.f32.mrf.mxu0
    %v1040 = vadd.f32 %v1021, %v1039
    %1041 = vmatmul.f32.gmra.mxu0 %v993
    %v1042 = vpop.f32.mrf.mxu0
    %v1043 = vadd.f32 %v1021, %v1042
    %1044 = vdwg.mxu0
    %v1046 = vsel %vm192, %v983, 0
    %v1049 = vsel %vm192, %v1013, 0
    %1051 = vmatpush.xpose.msra.mxu0 0.0
    %1052 = vmatpush.xpose.msra.mxu0 0.0
    %1053 = vmatpush.xpose.msra.mxu0 0.0
    %1054 = vmatpush.xpose.msra.mxu0 0.0
    %1055 = vmatpush.xpose.msra.mxu0 0.0
    %1056 = vmatpush.xpose.msra.mxu0 0.0
    %1057 = vmatpush.xpose.msra.mxu0 0.0
    %1058 = vmatpush.xpose.msra.mxu0 0.0
    %1059 = vmatpush.xpose.msra.mxu0 0.0
    %1060 = vmatpush.xpose.msra.mxu0 0.0
    %1061 = vmatpush.xpose.msra.mxu0 0.0
    %1062 = vmatpush.xpose.msra.mxu0 0.0
    %1063 = vmatpush.xpose.msra.mxu0 0.0
    %1064 = vmatpush.xpose.msra.mxu0 0.0
    %1065 = vmatpush.xpose.msra.mxu0 0.0
    %1066 = vmatpush.xpose.msra.mxu0 %v1049
    %1067 = vmatmul.f32.gmra.mxu0 %v1046
    %v1068 = vpop.f32.mrf.mxu0
    %v1069 = vadd.f32 0.0, %v1068
    %1070 = vdwg.mxu0
    %v1071 = vmul.f32 %v1069, 0.35355338
    %vm1072 = vcmask 57344
    %v1073 = vsel %vm1072, %v1071, -inf
    %1074 = vmax.xlane.f32.xlu0 %v1073
    %v1075 = vpop.xlane.xlu0 %1074
    %v1076 = vsub.f32 %v1071, %v1075
    %v1077 = vmul.f32 %v1076, 1.442695
    %v1078 = vpow.pop %v1077
    %v1079 = vsel %vm1072, %v1078, 0.0
    %1080 = vadd.xlane.f32.xlu0 %v1079
    %v1081 = vpop.xlane.xlu0 %1080
    %v1082 = vrcp.pop %v1081
    %v1083 = vmul.f32 %v1078, %v1082
    %v1085 = vsel %vm192, %v1083, 0
    %1087 = vmatpush.msra.mxu0 0.0
    %1088 = vmatpush.msra.mxu0 0.0
    %1089 = vmatpush.msra.mxu0 0.0
    %1090 = vmatpush.msra.mxu0 0.0
    %1091 = vmatpush.msra.mxu0 0.0
    %1092 = vmatpush.msra.mxu0 0.0
    %1093 = vmatpush.msra.mxu0 0.0
    %1094 = vmatpush.msra.mxu0 0.0
    %1095 = vmatpush.msra.mxu0 0.0
    %1096 = vmatpush.msra.mxu0 0.0
    %1097 = vmatpush.msra.mxu0 0.0
    %1098 = vmatpush.msra.mxu0 0.0
    %1099 = vmatpush.msra.mxu0 0.0
    %1100 = vmatpush.msra.mxu0 0.0
    %1101 = vmatpush.msra.mxu0 0.0
    %1102 = vmatpush.msra.mxu0 %v1040
    %1103 = vmatmul.f32.gmra.mxu0 %v1085
    %v1104 = vpop.f32.mrf.mxu0
    %v1105 = vadd.f32 0.0, %v1104
    %1106 = vdwg.mxu0
    %1107 = vrot.lane.b32.xlu0 %v983, 120
    %v1108 = vpop.permute.xlu0 %1107
    %1109 = vrot.lane.b32.xlu0 %v1013, 120
    %v1110 = vpop.permute.xlu0 %1109
    %v1111 = vsel %vm192, %v1108, 0
    %v1113 = vsel %vm192, %v1110, 0
    %1115 = vmatpush.xpose.msra.mxu0 0.0
    %1116 = vmatpush.xpose.msra.mxu0 0.0
    %1117 = vmatpush.xpose.msra.mxu0 0.0
    %1118 = vmatpush.xpose.msra.mxu0 0.0
    %1119 = vmatpush.xpose.msra.mxu0 0.0
    %1120 = vmatpush.xpose.msra.mxu0 0.0
    %1121 = vmatpush.xpose.msra.mxu0 0.0
    %1122 = vmatpush.xpose.msra.mxu0 0.0
    %1123 = vmatpush.xpose.msra.mxu0 0.0
    %1124 = vmatpush.xpose.msra.mxu0 0.0
    %1125 = vmatpush.xpose.msra.mxu0 0.0
    %1126 = vmatpush.xpose.msra.mxu0 0.0
    %1127 = vmatpush.xpose.msra.mxu0 0.0
    %1128 = vmatpush.xpose.msra.mxu0 0.0
    %1129 = vmatpush.xpose.msra.mxu0 0.0
    %1130 = vmatpush.xpose.msra.mxu0 %v1113
    %1131 = vmatmul.f32.gmra.mxu0 %v1111
    %v1132 = vpop.f32.mrf.mxu0
    %v1133 = vadd.f32 0.0, %v1132
    %1134 = vdwg.mxu0
    %v1135 = vmul.f32 %v1133, 0.35355338
    %v1136 = vsel %vm1072, %v1135, -inf
    %1137 = vmax.xlane.f32.xlu0 %v1136
    %v1138 = vpop.xlane.xlu0 %1137
    %v1139 = vsub.f32 %v1135, %v1138
    %v1140 = vmul.f32 %v1139, 1.442695
    %v1141 = vpow.pop %v1140
    %v1142 = vsel %vm1072, %v1141, 0.0
    %1143 = vadd.xlane.f32.xlu0 %v1142
    %v1144 = vpop.xlane.xlu0 %1143
    %v1145 = vrcp.pop %v1144
    %v1146 = vmul.f32 %v1141, %v1145
    %1148 = vrot.lane.b32.xlu0 %v1040, 120
    %v1149 = vpop.permute.xlu0 %1148
    %v1152 = vsel %vm192, %v1146, 0
    %1154 = vmatpush.msra.mxu0 0.0
    %1155 = vmatpush.msra.mxu0 0.0
    %1156 = vmatpush.msra.mxu0 0.0
    %1157 = vmatpush.msra.mxu0 0.0
    %1158 = vmatpush.msra.mxu0 0.0
    %1159 = vmatpush.msra.mxu0 0.0
    %1160 = vmatpush.msra.mxu0 0.0
    %1161 = vmatpush.msra.mxu0 0.0
    %1162 = vmatpush.msra.mxu0 0.0
    %1163 = vmatpush.msra.mxu0 0.0
    %1164 = vmatpush.msra.mxu0 0.0
    %1165 = vmatpush.msra.mxu0 0.0
    %1166 = vmatpush.msra.mxu0 0.0
    %1167 = vmatpush.msra.mxu0 0.0
    %1168 = vmatpush.msra.mxu0 0.0
    %1169 = vmatpush.msra.mxu0 %v1149
    %1170 = vmatmul.f32.gmra.mxu0 %v1152
    %v1171 = vpop.f32.mrf.mxu0
    %v1172 = vadd.f32 0.0, %v1171
    %1173 = vdwg.mxu0
    %1174 = vrot.lane.b32.xlu0 %v983, 112
    %v1175 = vpop.permute.xlu0 %1174
    %1176 = vrot.lane.b32.xlu0 %v1013, 112
    %v1177 = vpop.permute.xlu0 %1176
    %v1178 = vsel %vm192, %v1175, 0
    %v1180 = vsel %vm192, %v1177, 0
    %1182 = vmatpush.xpose.msra.mxu0 0.0
    %1183 = vmatpush.xpose.msra.mxu0 0.0
    %1184 = vmatpush.xpose.msra.mxu0 0.0
    %1185 = vmatpush.xpose.msra.mxu0 0.0
    %1186 = vmatpush.xpose.msra.mxu0 0.0
    %1187 = vmatpush.xpose.msra.mxu0 0.0
    %1188 = vmatpush.xpose.msra.mxu0 0.0
    %1189 = vmatpush.xpose.msra.mxu0 0.0
    %1190 = vmatpush.xpose.msra.mxu0 0.0
    %1191 = vmatpush.xpose.msra.mxu0 0.0
    %1192 = vmatpush.xpose.msra.mxu0 0.0
    %1193 = vmatpush.xpose.msra.mxu0 0.0
    %1194 = vmatpush.xpose.msra.mxu0 0.0
    %1195 = vmatpush.xpose.msra.mxu0 0.0
    %1196 = vmatpush.xpose.msra.mxu0 0.0
    %1197 = vmatpush.xpose.msra.mxu0 %v1180
    %1198 = vmatmul.f32.gmra.mxu0 %v1178
    %v1199 = vpop.f32.mrf.mxu0
    %v1200 = vadd.f32 0.0, %v1199
    %1201 = vdwg.mxu0
    %v1202 = vmul.f32 %v1200, 0.35355338
    %v1203 = vsel %vm1072, %v1202, -inf
    %1204 = vmax.xlane.f32.xlu0 %v1203
    %v1205 = vpop.xlane.xlu0 %1204
    %v1206 = vsub.f32 %v1202, %v1205
    %v1207 = vmul.f32 %v1206, 1.442695
    %v1208 = vpow.pop %v1207
    %v1209 = vsel %vm1072, %v1208, 0.0
    %1210 = vadd.xlane.f32.xlu0 %v1209
    %v1211 = vpop.xlane.xlu0 %1210
    %v1212 = vrcp.pop %v1211
    %v1213 = vmul.f32 %v1208, %v1212
    %1214 = vrot.lane.b32.xlu0 %v1040, 112
    %v1215 = vpop.permute.xlu0 %1214
    %v1218 = vsel %vm192, %v1213, 0
    %1220 = vmatpush.msra.mxu0 0.0
    %1221 = vmatpush.msra.mxu0 0.0
    %1222 = vmatpush.msra.mxu0 0.0
    %1223 = vmatpush.msra.mxu0 0.0
    %1224 = vmatpush.msra.mxu0 0.0
    %1225 = vmatpush.msra.mxu0 0.0
    %1226 = vmatpush.msra.mxu0 0.0
    %1227 = vmatpush.msra.mxu0 0.0
    %1228 = vmatpush.msra.mxu0 0.0
    %1229 = vmatpush.msra.mxu0 0.0
    %1230 = vmatpush.msra.mxu0 0.0
    %1231 = vmatpush.msra.mxu0 0.0
    %1232 = vmatpush.msra.mxu0 0.0
    %1233 = vmatpush.msra.mxu0 0.0
    %1234 = vmatpush.msra.mxu0 0.0
    %1235 = vmatpush.msra.mxu0 %v1215
    %1236 = vmatmul.f32.gmra.mxu0 %v1218
    %v1237 = vpop.f32.mrf.mxu0
    %v1238 = vadd.f32 0.0, %v1237
    %1239 = vdwg.mxu0
    %1241 = vrot.lane.b32.xlu0 %v1172, 8
    %v1242 = vpop.permute.xlu0 %1241
    %1245 = vrot.lane.b32.xlu0 %v1238, 16
    %v1246 = vpop.permute.xlu0 %1245
    %v1248 = vsel %vm192, %v1105, %v1242
    %v1249 = vsel %vm79, %v1248, %v1246
    %v1250 = vrot.slane %v983, 1
    %v1251 = vsel %vm192, %v1250, 0
    %v1254 = vsel %vm192, %v1016, 0
    %1256 = vmatpush.xpose.msra.mxu0 0.0
    %1257 = vmatpush.xpose.msra.mxu0 0.0
    %1258 = vmatpush.xpose.msra.mxu0 0.0
    %1259 = vmatpush.xpose.msra.mxu0 0.0
    %1260 = vmatpush.xpose.msra.mxu0 0.0
    %1261 = vmatpush.xpose.msra.mxu0 0.0
    %1262 = vmatpush.xpose.msra.mxu0 0.0
    %1263 = vmatpush.xpose.msra.mxu0 0.0
    %1264 = vmatpush.xpose.msra.mxu0 0.0
    %1265 = vmatpush.xpose.msra.mxu0 0.0
    %1266 = vmatpush.xpose.msra.mxu0 0.0
    %1267 = vmatpush.xpose.msra.mxu0 0.0
    %1268 = vmatpush.xpose.msra.mxu0 0.0
    %1269 = vmatpush.xpose.msra.mxu0 0.0
    %1270 = vmatpush.xpose.msra.mxu0 0.0
    %1271 = vmatpush.xpose.msra.mxu0 %v1254
    %1272 = vmatmul.f32.gmra.mxu0 %v1251
    %v1273 = vpop.f32.mrf.mxu0
    %v1274 = vadd.f32 0.0, %v1273
    %1275 = vdwg.mxu0
    %v1276 = vmul.f32 %v1274, 0.35355338
    %v1277 = vsel %vm1072, %v1276, -inf
    %1278 = vmax.xlane.f32.xlu0 %v1277
    %v1279 = vpop.xlane.xlu0 %1278
    %v1280 = vsub.f32 %v1276, %v1279
    %v1281 = vmul.f32 %v1280, 1.442695
    %v1282 = vpow.pop %v1281
    %v1283 = vsel %vm1072, %v1282, 0.0
    %1284 = vadd.xlane.f32.xlu0 %v1283
    %v1285 = vpop.xlane.xlu0 %1284
    %v1286 = vrcp.pop %v1285
    %v1287 = vmul.f32 %v1282, %v1286
    %v1289 = vsel %vm192, %v1287, 0
    %1291 = vmatpush.msra.mxu0 0.0
    %1292 = vmatpush.msra.mxu0 0.0
    %1293 = vmatpush.msra.mxu0 0.0
    %1294 = vmatpush.msra.mxu0 0.0
    %1295 = vmatpush.msra.mxu0 0.0
    %1296 = vmatpush.msra.mxu0 0.0
    %1297 = vmatpush.msra.mxu0 0.0
    %1298 = vmatpush.msra.mxu0 0.0
    %1299 = vmatpush.msra.mxu0 0.0
    %1300 = vmatpush.msra.mxu0 0.0
    %1301 = vmatpush.msra.mxu0 0.0
    %1302 = vmatpush.msra.mxu0 0.0
    %1303 = vmatpush.msra.mxu0 0.0
    %1304 = vmatpush.msra.mxu0 0.0
    %1305 = vmatpush.msra.mxu0 0.0
    %1306 = vmatpush.msra.mxu0 %v1043
    %1307 = vmatmul.f32.gmra.mxu0 %v1289
    %v1308 = vpop.f32.mrf.mxu0
    %v1309 = vadd.f32 0.0, %v1308
    %1310 = vdwg.mxu0
    %1311 = vrot.lane.b32.xlu0 %v1250, 120
    %v1312 = vpop.permute.xlu0 %1311
    %1313 = vrot.lane.b32.xlu0 %v1016, 120
    %v1314 = vpop.permute.xlu0 %1313
    %v1315 = vsel %vm192, %v1312, 0
    %v1317 = vsel %vm192, %v1314, 0
    %1319 = vmatpush.xpose.msra.mxu0 0.0
    %1320 = vmatpush.xpose.msra.mxu0 0.0
    %1321 = vmatpush.xpose.msra.mxu0 0.0
    %1322 = vmatpush.xpose.msra.mxu0 0.0
    %1323 = vmatpush.xpose.msra.mxu0 0.0
    %1324 = vmatpush.xpose.msra.mxu0 0.0
    %1325 = vmatpush.xpose.msra.mxu0 0.0
    %1326 = vmatpush.xpose.msra.mxu0 0.0
    %1327 = vmatpush.xpose.msra.mxu0 0.0
    %1328 = vmatpush.xpose.msra.mxu0 0.0
    %1329 = vmatpush.xpose.msra.mxu0 0.0
    %1330 = vmatpush.xpose.msra.mxu0 0.0
    %1331 = vmatpush.xpose.msra.mxu0 0.0
    %1332 = vmatpush.xpose.msra.mxu0 0.0
    %1333 = vmatpush.xpose.msra.mxu0 0.0
    %1334 = vmatpush.xpose.msra.mxu0 %v1317
    %1335 = vmatmul.f32.gmra.mxu0 %v1315
    %v1336 = vpop.f32.mrf.mxu0
    %v1337 = vadd.f32 0.0, %v1336
    %1338 = vdwg.mxu0
    %v1339 = vmul.f32 %v1337, 0.35355338
    %v1340 = vsel %vm1072, %v1339, -inf
    %1341 = vmax.xlane.f32.xlu0 %v1340
    %v1342 = vpop.xlane.xlu0 %1341
    %v1343 = vsub.f32 %v1339, %v1342
    %v1344 = vmul.f32 %v1343, 1.442695
    %v1345 = vpow.pop %v1344
    %v1346 = vsel %vm1072, %v1345, 0.0
    %1347 = vadd.xlane.f32.xlu0 %v1346
    %v1348 = vpop.xlane.xlu0 %1347
    %v1349 = vrcp.pop %v1348
    %v1350 = vmul.f32 %v1345, %v1349
    %1352 = vrot.lane.b32.xlu0 %v1043, 120
    %v1353 = vpop.permute.xlu0 %1352
    %v1356 = vsel %vm192, %v1350, 0
    %1358 = vmatpush.msra.mxu0 0.0
    %1359 = vmatpush.msra.mxu0 0.0
    %1360 = vmatpush.msra.mxu0 0.0
    %1361 = vmatpush.msra.mxu0 0.0
    %1362 = vmatpush.msra.mxu0 0.0
    %1363 = vmatpush.msra.mxu0 0.0
    %1364 = vmatpush.msra.mxu0 0.0
    %1365 = vmatpush.msra.mxu0 0.0
    %1366 = vmatpush.msra.mxu0 0.0
    %1367 = vmatpush.msra.mxu0 0.0
    %1368 = vmatpush.msra.mxu0 0.0
    %1369 = vmatpush.msra.mxu0 0.0
    %1370 = vmatpush.msra.mxu0 0.0
    %1371 = vmatpush.msra.mxu0 0.0
    %1372 = vmatpush.msra.mxu0 0.0
    %1373 = vmatpush.msra.mxu0 %v1353
    %1374 = vmatmul.f32.gmra.mxu0 %v1356
    %v1375 = vpop.f32.mrf.mxu0
    %v1376 = vadd.f32 0.0, %v1375
    %1377 = vdwg.mxu0
    %1378 = vrot.lane.b32.xlu0 %v1250, 112
    %v1379 = vpop.permute.xlu0 %1378
    %1380 = vrot.lane.b32.xlu0 %v1016, 112
    %v1381 = vpop.permute.xlu0 %1380
    %v1382 = vsel %vm192, %v1379, 0
    %v1384 = vsel %vm192, %v1381, 0
    %1386 = vmatpush.xpose.msra.mxu0 0.0
    %1387 = vmatpush.xpose.msra.mxu0 0.0
    %1388 = vmatpush.xpose.msra.mxu0 0.0
    %1389 = vmatpush.xpose.msra.mxu0 0.0
    %1390 = vmatpush.xpose.msra.mxu0 0.0
    %1391 = vmatpush.xpose.msra.mxu0 0.0
    %1392 = vmatpush.xpose.msra.mxu0 0.0
    %1393 = vmatpush.xpose.msra.mxu0 0.0
    %1394 = vmatpush.xpose.msra.mxu0 0.0
    %1395 = vmatpush.xpose.msra.mxu0 0.0
    %1396 = vmatpush.xpose.msra.mxu0 0.0
    %1397 = vmatpush.xpose.msra.mxu0 0.0
    %1398 = vmatpush.xpose.msra.mxu0 0.0
    %1399 = vmatpush.xpose.msra.mxu0 0.0
    %1400 = vmatpush.xpose.msra.mxu0 0.0
    %1401 = vmatpush.xpose.msra.mxu0 %v1384
    %1402 = vmatmul.f32.gmra.mxu0 %v1382
    %v1403 = vpop.f32.mrf.mxu0
    %v1404 = vadd.f32 0.0, %v1403
    %1405 = vdwg.mxu0
    %v1406 = vmul.f32 %v1404, 0.35355338
    %v1407 = vsel %vm1072, %v1406, -inf
    %1408 = vmax.xlane.f32.xlu0 %v1407
    %v1409 = vpop.xlane.xlu0 %1408
    %v1410 = vsub.f32 %v1406, %v1409
    %v1411 = vmul.f32 %v1410, 1.442695
    %v1412 = vpow.pop %v1411
    %v1413 = vsel %vm1072, %v1412, 0.0
    %1414 = vadd.xlane.f32.xlu0 %v1413
    %v1415 = vpop.xlane.xlu0 %1414
    %v1416 = vrcp.pop %v1415
    %v1417 = vmul.f32 %v1412, %v1416
    %1418 = vrot.lane.b32.xlu0 %v1043, 112
    %v1419 = vpop.permute.xlu0 %1418
    %v1422 = vsel %vm192, %v1417, 0
    %1424 = vmatpush.msra.mxu0 0.0
    %1425 = vmatpush.msra.mxu0 0.0
    %1426 = vmatpush.msra.mxu0 0.0
    %1427 = vmatpush.msra.mxu0 0.0
    %1428 = vmatpush.msra.mxu0 0.0
    %1429 = vmatpush.msra.mxu0 0.0
    %1430 = vmatpush.msra.mxu0 0.0
    %1431 = vmatpush.msra.mxu0 0.0
    %1432 = vmatpush.msra.mxu0 0.0
    %1433 = vmatpush.msra.mxu0 0.0
    %1434 = vmatpush.msra.mxu0 0.0
    %1435 = vmatpush.msra.mxu0 0.0
    %1436 = vmatpush.msra.mxu0 0.0
    %1437 = vmatpush.msra.mxu0 0.0
    %1438 = vmatpush.msra.mxu0 0.0
    %1439 = vmatpush.msra.mxu0 %v1419
    %1440 = vmatmul.f32.gmra.mxu0 %v1422
    %v1441 = vpop.f32.mrf.mxu0
    %v1442 = vadd.f32 0.0, %v1441
    %1443 = vdwg.mxu0
    %1445 = vrot.lane.b32.xlu0 %v1376, 8
    %v1446 = vpop.permute.xlu0 %1445
    %1449 = vrot.lane.b32.xlu0 %v1442, 16
    %v1450 = vpop.permute.xlu0 %1449
    %v1452 = vsel %vm192, %v1309, %v1446
    %v1453 = vsel %vm79, %v1452, %v1450
    %v1455 = vrot.slane %v1453, 7
    %v1457 = vsel %vm73, %v1249, %v1455
    %v1458 = vld [vmem:[#allocation7 + $0x140] sm:$0xff]
    %v1459 = vld [vmem:[#allocation7 + $0x148] sm:$0xff]
    %v1460 = vld [vmem:[#allocation7 + $0x150] sm:$0xff]
    %v1461 = vld [vmem:[#allocation7 + $0x160] sm:$0x1]
    %v1462 = vperm.slane %v1461, 0
    %v1464 = vsel %vm108, %v1457, 0
    %1466 = vmatpush.msra.mxu0 0.0
    %1467 = vmatpush.msra.mxu0 0.0
    %1468 = vmatpush.msra.mxu0 0.0
    %1469 = vmatpush.msra.mxu0 0.0
    %1470 = vmatpush.msra.mxu0 0.0
    %1471 = vmatpush.msra.mxu0 0.0
    %1472 = vmatpush.msra.mxu0 0.0
    %1473 = vmatpush.msra.mxu0 0.0
    %1474 = vmatpush.msra.mxu0 0.0
    %1475 = vmatpush.msra.mxu0 0.0
    %1476 = vmatpush.msra.mxu0 0.0
    %1477 = vmatpush.msra.mxu0 0.0
    %1478 = vmatpush.msra.mxu0 0.0
    %1479 = vmatpush.msra.mxu0 %v1460
    %1480 = vmatpush.msra.mxu0 %v1459
    %1481 = vmatpush.msra.mxu0 %v1458
    %1482 = vmatmul.f32.gmra.mxu0 %v1464
    %v1483 = vpop.f32.mrf.mxu0
    %v1484 = vadd.f32 %v1462, %v1483
    %1485 = vdwg.mxu0
    %v1486 = vadd.f32 %v956, %v1484
    %v1487 = vsel %vm930, %v1486, 0.0
    %1488 = vadd.xlane.f32.xlu0 %v1487
    %v1489 = vpop.xlane.xlu0 %1488
    %v1490 = vmul.f32 %v1489, %v649
    %v1491 = vsub.f32 %v1486, %v1490
    %v1492 = vmul.f32 %v1491, %v1491
    %v1493 = vsel %vm930, %v1492, 0.0
    %1494 = vadd.xlane.f32.xlu0 %v1493
    %v1495 = vpop.xlane.xlu0 %1494
    %v1496 = vmul.f32 %v1495, %v649
    %v1497 = vadd.f32 %v1496, 1e-05
    %v1498 = vrsqrt.pop %v1497
    %v1499 = vmul.f32 %v1498, %v1497
    %v1500 = vmul.f32 %v1499, %v1498
    %v1501 = vmul.f32 0.5, %v1500
    %v1502 = vsub.f32 1.5, %v1501
    %v1503 = vmul.f32 %v1498, %v1502
    %vm1504 = vweird.f32 %v1497
    %vm1505 = vweird.f32 %v1498
    %vm1506 = vmor %vm1504, %vm1505
    %v1507 = vsel %vm1506, %v1498, %v1503
    %v1508 = vmul.f32 %v1491, %v1507
    %v1509 = vperm.slane %v62, 4
    %v1510 = vmul.f32 %v1508, %v1509
    %v1511 = vperm.slane %v63, 4
    %v1512 = vadd.f32 %v1510, %v1511
    %v1513 = vld [vmem:[#allocation7 + $0x210] sm:$0xff]
    %v1514 = vld [vmem:[#allocation7 + $0x218] sm:$0xff]
    %v1515 = vld [vmem:[#allocation7 + $0x220] sm:$0xff]
    %v1516 = vld [vmem:[#allocation7 + $0x228] sm:$0x1]
    %v1517 = vperm.slane %v1516, 0
    %v1519 = vsel %vm108, %v1512, 0
    %1521 = vmatpush.msra.mxu0 0.0
    %1522 = vmatpush.msra.mxu0 0.0
    %1523 = vmatpush.msra.mxu0 0.0
    %1524 = vmatpush.msra.mxu0 0.0
    %1525 = vmatpush.msra.mxu0 0.0
    %1526 = vmatpush.msra.mxu0 0.0
    %1527 = vmatpush.msra.mxu0 0.0
    %1528 = vmatpush.msra.mxu0 0.0
    %1529 = vmatpush.msra.mxu0 0.0
    %1530 = vmatpush.msra.mxu0 0.0
    %1531 = vmatpush.msra.mxu0 0.0
    %1532 = vmatpush.msra.mxu0 0.0
    %1533 = vmatpush.msra.mxu0 0.0
    %1534 = vmatpush.msra.mxu0 %v1515
    %1535 = vmatpush.msra.mxu0 %v1514
    %1536 = vmatpush.msra.mxu0 %v1513
    %1537 = vmatmul.f32.gmra.mxu0 %v1519
    %v1538 = vpop.f32.mrf.mxu0
    %v1539 = vadd.f32 %v1517, %v1538
    %1540 = vdwg.mxu0
    %v1541 = vmax.f32 %v1539, 0.0
    %v1542 = vld [vmem:[#allocation7 + $0x230] sm:$0xff]
    %v1543 = vld [vmem:[#allocation7 + $0x238] sm:$0xff]
    %v1544 = vld [vmem:[#allocation7 + $0x240] sm:$0xff]
    %v1545 = vld [vmem:[#allocation7 + $0x248] sm:$0xff]
    %v1546 = vld [vmem:[#allocation7 + $0x250] sm:$0xff]
    %v1547 = vld [vmem:[#allocation7 + $0x258] sm:$0xff]
    %v1548 = vld [vmem:[#allocation7 + $0x260] sm:$0xff]
    %v1549 = vld [vmem:[#allocation7 + $0x268] sm:$0xff]
    %v1550 = vld [vmem:[#allocation7 + $0x270] sm:$0xff]
    %v1551 = vld [vmem:[#allocation7 + $0x278] sm:$0xff]
    %v1552 = vld [vmem:[#allocation7 + $0x280] sm:$0xff]
    %v1553 = vld [vmem:[#allocation7 + $0x288] sm:$0xff]
    %v1554 = vld [vmem:[#allocation7 + $0x290] sm:$0xff]
    %v1555 = vld [vmem:[#allocation7 + $0x298] sm:$0xff]
    %v1556 = vld [vmem:[#allocation7 + $0x2a0] sm:$0xff]
    %v1557 = vld [vmem:[#allocation7 + $0x2a8] sm:$0xff]
    %v1558 = vld [vmem:[#allocation7 + $0x2b0] sm:$0x1]
    %v1559 = vperm.slane %v1558, 0
    %1560 = vmatpush.msra.mxu0 %v1557
    %1561 = vmatpush.msra.mxu0 %v1556
    %1562 = vmatpush.msra.mxu0 %v1555
    %1563 = vmatpush.msra.mxu0 %v1554
    %1564 = vmatpush.msra.mxu0 %v1553
    %1565 = vmatpush.msra.mxu0 %v1552
    %1566 = vmatpush.msra.mxu0 %v1551
    %1567 = vmatpush.msra.mxu0 %v1550
    %1568 = vmatpush.msra.mxu0 %v1549
    %1569 = vmatpush.msra.mxu0 %v1548
    %1570 = vmatpush.msra.mxu0 %v1547
    %1571 = vmatpush.msra.mxu0 %v1546
    %1572 = vmatpush.msra.mxu0 %v1545
    %1573 = vmatpush.msra.mxu0 %v1544
    %1574 = vmatpush.msra.mxu0 %v1543
    %1575 = vmatpush.msra.mxu0 %v1542
    %1576 = vmatmul.f32.gmra.mxu0 %v1541
    %v1577 = vpop.f32.mrf.mxu0
    %v1578 = vadd.f32 %v1559, %v1577
    %1579 = vdwg.mxu0
    %v1580 = vadd.f32 %v1512, %v1578
    %v1581 = vsel %vm930, %v1580, 0.0
    %1582 = vadd.xlane.f32.xlu0 %v1581
    %v1583 = vpop.xlane.xlu0 %1582
    %v1584 = vmul.f32 %v1583, %v649
    %v1585 = vsub.f32 %v1580, %v1584
    %v1586 = vmul.f32 %v1585, %v1585
    %v1587 = vsel %vm930, %v1586, 0.0
    %1588 = vadd.xlane.f32.xlu0 %v1587
    %v1589 = vpop.xlane.xlu0 %1588
    %v1590 = vmul.f32 %v1589, %v649
    %v1591 = vadd.f32 %v1590, 1e-05
    %v1592 = vrsqrt.pop %v1591
    %v1593 = vmul.f32 %v1592, %v1591
    %v1594 = vmul.f32 %v1593, %v1592
    %v1595 = vmul.f32 0.5, %v1594
    %v1596 = vsub.f32 1.5, %v1595
    %v1597 = vmul.f32 %v1592, %v1596
    %vm1598 = vweird.f32 %v1591
    %vm1599 = vweird.f32 %v1592
    %vm1600 = vmor %vm1598, %vm1599
    %v1601 = vsel %vm1600, %v1592, %v1597
    %v1602 = vmul.f32 %v1585, %v1601
    %v1603 = vperm.slane %v62, 5
    %v1604 = vmul.f32 %v1602, %v1603
    %v1605 = vperm.slane %v63, 5
    %v1606 = vadd.f32 %v1604, %v1605
    %v1607 = vsel %vm930, %v1606, 0.0
    %1608 = vadd.xlane.f32.xlu0 %v1607
    %v1609 = vpop.xlane.xlu0 %1608
    %v1610 = vmul.f32 %v1609, %v649
    %v1611 = vsub.f32 %v1606, %v1610
    %v1612 = vmul.f32 %v1611, %v1611
    %v1613 = vsel %vm930, %v1612, 0.0
    %1614 = vadd.xlane.f32.xlu0 %v1613
    %v1615 = vpop.xlane.xlu0 %1614
    %v1616 = vmul.f32 %v1615, %v649
    %v1617 = vadd.f32 %v1616, 1e-05
    %v1618 = vrsqrt.pop %v1617
    %v1619 = vmul.f32 %v1618, %v1617
    %v1620 = vmul.f32 %v1619, %v1618
    %v1621 = vmul.f32 0.5, %v1620
    %v1622 = vsub.f32 1.5, %v1621
    %v1623 = vmul.f32 %v1618, %v1622
    %vm1624 = vweird.f32 %v1617
    %vm1625 = vweird.f32 %v1618
    %vm1626 = vmor %vm1624, %vm1625
    %v1627 = vsel %vm1626, %v1618, %v1623
    %v1628 = vmul.f32 %v1611, %v1627
    %v1629 = vperm.slane %v62, 6
    %v1630 = vmul.f32 %v1628, %v1629
    %v1631 = vperm.slane %v63, 6
    %v1632 = vadd.f32 %v1630, %v1631
    %vm1633 = vcmask 188416
    %1634 = vst.msk [vmem:[#allocation8] sm:$0x1] %vm1633, %v1632
    %s1635 = scalar_lea.vmem [#allocation8], 1
    %vm1636 = vcmask 189441
    %1637 = vst.msk [vmem:[%s1635 - $0x1] sm:$0x2] %vm1636, %v1632
    // Predicated region
    $region26: #{tpu_custom_call.1} parent=1 // pred_check
      _
    $region27: #{tpu_custom_call.1} parent=1 // pred_check_branch
      %1639 = sbr.rel (0) target = $region29
    $region28: #{tpu_custom_call.1} parent=1 // pred_region
      %1641 = vsyncadd [#allocation4], 0
      %s1642 = sshll.u32 [#allocation8], 4
      %s1643 = int_to_ptr.vmem [resolvable:$true] %s1642
      %s1644 = sshll.u32 %s3, 4
      %s1645 = int_to_ptr.hbm [resolvable:$true] %s1644
      %1650 = dma.vmem_to_hbm [thread:$0]  %s1643, 32, %s1645, [#allocation4], 16, 16, 1
    $region29: #{tpu_custom_call.1} parent=1 // pred_fallthru
      _
    // Predicated region
    $region30: #{tpu_custom_call.1} parent=1 // pred_check
      _
    $region31: #{tpu_custom_call.1} parent=1 // pred_check_branch
      %1652 = sbr.rel (0) target = $region33
    $region32: #{tpu_custom_call.1} parent=1 // pred_region
      %1654 = dma.done [#allocation4], 32
    $region33: #{tpu_custom_call.1} parent=1 // pred_fallthru
      _
    %1655 = vsyncpa [#allocation3], 1
    %1656 = vsyncpa [#allocation6], 1
    %1657 = vsyncpa [#allocation4], 1

</llo_original>
